<compile_context>
chip_gen: v7x
topology: tpu7x:2x2x1
jax: 0.10.0
libtpu: 0.0.40
codegen_flags: <defaults>
</compile_context>

<pallas_src>
import functools

import jax
import jax.numpy as jnp
from jax.experimental import pallas as pl
from jax.experimental.pallas import tpu as pltpu


_VMEM_SPEC = pl.BlockSpec(memory_space=pltpu.MemorySpace.VMEM)


# ----------------------------------------------------------------------------
# Fused kernel: conv3x3-s2 (+ReLU) -> conv1x1 (+ReLU) -> fc -> log_softmax ->
# NLL(mean) for both branches, returning loss_same + loss_diff.
# ----------------------------------------------------------------------------
def club_fused_kernel(perm_ref,                              # SMEM (B,) int32 (scalar prefetch)
                      p1_ref, p2_ref,                        # (B*npos, dim*9) im2col of x1 / x2
                      w1a_ref, w1b_ref,                      # (dim*9, dim) conv1 weight halves
                      b1_ref,                                # (1, dim)
                      w2_ref,                                # (dim, 128)  conv2 (1x1) weight
                      b2_ref,                                # (1, 128)
                      wfc0_ref, wfc1_ref,                    # (2B*npos, 128) per-class fc weights
                      bfc_ref,                               # (1, 2)
                      o_ref,                                 # (1, 1) loss_same + loss_diff
                      b_scr, h_scr,                          # VMEM scratch
                      *, batch, npos, dim):
    half = batch * npos            # rows of one branch, sample-major (n*npos + p)
    n_act = 2 * half               # same-branch rows then diff-branch rows
    rows = 2 * batch               # (sample, branch) score rows

    # --- conv1: 3x3 stride-2 conv as im2col matmuls (MXU, f32 accumulate). ---
    # The x1-channel half `a` is identical for the same/diff branches -> computed once.
    a = jnp.dot(p1_ref[...], w1a_ref[...], preferred_element_type=jnp.float32)  # (half, dim)
    b = jnp.dot(p2_ref[...], w1b_ref[...], preferred_element_type=jnp.float32)  # (half, dim)

    # --- branch construction (in-kernel, using the prefetched permutation). ---
    # diff-branch sample n uses x2[perm[n]]  =>  its x2-half of conv1 is b's contiguous
    # per-sample row block starting at perm[n]*npos (rows are sample-major).
    b_scr[...] = b
    h_scr[0:half, :] = a + b                                   # same branch
    for n in range(batch):                                     # static unroll (tiny batch)
        h_scr[half + n * npos: half + (n + 1) * npos, :] = (
            a[n * npos:(n + 1) * npos, :]
            + b_scr[pl.ds(perm_ref[n] * npos, npos), :])
    h = jnp.maximum(h_scr[...] + b1_ref[...], 0.0)             # (n_act, dim)

    # --- conv2: 1x1 conv (K = dim) on the VPU: `dim` broadcast-FMAs instead of an ---
    # MXU push whose systolic array would be ~97% idle at K = dim.
    w2 = w2_ref[...]
    f = h[:, 0:1] * w2[0:1, :]
    for c in range(1, dim):
        f = f + h[:, c:c + 1] * w2[c:c + 1, :]
    f = jnp.maximum(f + b2_ref[...], 0.0)                      # (n_act, 128)

    # --- fc(3*3*128 -> 2): one weighted lane-reduction per class + one tiny pooling ---
    # matmul (replaces 9 masked (2B,128)x(128,2) MXU pushes; single MXU push total).
    s0 = jnp.sum(f * wfc0_ref[...], axis=1, keepdims=True)     # (n_act, 1)
    s1 = jnp.sum(f * wfc1_ref[...], axis=1, keepdims=True)
    rs = jnp.concatenate([s0, s1], axis=1)                     # (n_act, 2)

    r_idx = jax.lax.broadcasted_iota(jnp.int32, (rows, n_act), 1)
    g_idx = jax.lax.broadcasted_iota(jnp.int32, (rows, n_act), 0)
    pool = jnp.where((r_idx >= g_idx * npos) & (r_idx < (g_idx + 1) * npos),
                     1.0, 0.0)                                 # (rows, n_act) 0/1 pooling
    score = jnp.dot(pool, rs, preferred_element_type=jnp.float32) + bfc_ref[...]  # (rows, 2)

    # --- log_softmax over 2 classes + mean NLL: rows [0,B) = "same" (target 1), ---
    # rows [B,2B) = "diff" (target 0); loss_same + loss_diff = sum(nll) / B.
    c0 = score[:, 0:1]
    c1 = score[:, 1:2]
    m = jnp.maximum(c0, c1)
    lse = m + jnp.log(jnp.exp(c0 - m) + jnp.exp(c1 - m))
    ridx = jax.lax.broadcasted_iota(jnp.int32, (rows, 1), 0)
    tgt = jnp.where(ridx < batch, c1, c0)
    o_ref[...] = jnp.sum(lse - tgt, axis=(0, 1), keepdims=True) / batch


# ----------------------------------------------------------------------------
# Wrapper: CLUB.forward(x1, x2, reverse)  (grad_reverse is identity forward)
# ----------------------------------------------------------------------------
def club_forward(x1, x2, perm, params):
    B, dim, H, W = x1.shape

    def im2col(x):
        # (B, C, 7, 7) -> (B*npos, C*9), sample-major rows (n*npos + oh*3 + ow),
        # feature order channel-major (c, kh, kw) == PyTorch OIHW weight flatten.
        p4 = jax.lax.conv_general_dilated_patches(
            x.astype(jnp.float32), (3, 3), (2, 2), "VALID",
            dimension_numbers=("NCHW", "OIHW", "NCHW"))        # (B, C*9, oh, ow)
        oh, ow = p4.shape[2], p4.shape[3]
        return p4.transpose(0, 2, 3, 1).reshape(B * oh * ow, -1), oh * ow

    p1, npos = im2col(x1)                                      # (B*npos, dim*9)
    p2, _ = im2col(x2)                                         # (B*npos, dim*9)

    assert params["w2"].shape[:2] == (128, dim)
    assert params["wfc"].shape == (2, 128 * npos)

    # Weight prep (tiny; no zero padding -- Mosaic pads lanes/sublanes in VMEM).
    w1 = params["w1"].astype(jnp.float32)                      # (dim, 2*dim, 3, 3)
    w1a = w1[:, :dim].reshape(dim, dim * 9).T                  # (dim*9, dim)  x1-channel half
    w1b = w1[:, dim:].reshape(dim, dim * 9).T                  # (dim*9, dim)  x2-channel half
    b1 = params["b1"].reshape(1, dim).astype(jnp.float32)
    w2 = params["w2"].reshape(128, dim).T.astype(jnp.float32)  # (dim, 128)
    b2 = params["b2"].reshape(1, 128).astype(jnp.float32)
    # fc weight (2, 128*npos), PyTorch flatten order (c, p): Wcls[p, c] = wfc[cls, c*npos + p],
    # tiled over the 2B samples so the kernel's per-row weighting is a plain elementwise mul.
    wfc_pc = params["wfc"].reshape(2, 128, npos).astype(jnp.float32)
    wfc0t = jnp.tile(wfc_pc[0].T, (2 * B, 1))                  # (2B*npos, 128)
    wfc1t = jnp.tile(wfc_pc[1].T, (2 * B, 1))
    bfc = params["bfc"].reshape(1, 2).astype(jnp.float32)

    grid_spec = pltpu.PrefetchScalarGridSpec(
        num_scalar_prefetch=1,
        grid=(1,),
        in_specs=[_VMEM_SPEC] * 10,
        out_specs=_VMEM_SPEC,
        scratch_shapes=[pltpu.VMEM((B * npos, dim), jnp.float32),       # b_scr
                        pltpu.VMEM((2 * B * npos, dim), jnp.float32)],  # h_scr
    )
    loss = pl.pallas_call(
        functools.partial(club_fused_kernel, batch=B, npos=npos, dim=dim),
        out_shape=jax.ShapeDtypeStruct((1, 1), jnp.float32),
        grid_spec=grid_spec,
        compiler_params=pltpu.CompilerParams(dimension_semantics=("arbitrary",)),
    )(perm.astype(jnp.int32), p1, p2, w1a, w1b, b1, w2, b2, wfc0t, wfc1t, bfc)
    return loss[0, 0]


# ----------------------------------------------------------------------------
# Pure-JAX reference (lax.conv, NCHW) to validate the Pallas implementation.
# ----------------------------------------------------------------------------
def club_reference(x1, x2, perm, params):
    def out_score(x):
        y = jax.lax.conv_general_dilated(
            x, params["w1"], (2, 2), "VALID",
            dimension_numbers=("NCHW", "OIHW", "NCHW")) + params["b1"][None, :, None, None]
        y = jnp.maximum(y, 0.0)
        y = jax.lax.conv_general_dilated(
            y, params["w2"], (1, 1), "VALID",
            dimension_numbers=("NCHW", "OIHW", "NCHW")) + params["b2"][None, :, None, None]
        return jnp.maximum(y, 0.0)

    B = x1.shape[0]
    same_x = jnp.concatenate([x1, x2], axis=1)
    diff_x = jnp.concatenate([x1, x2[perm]], axis=1)
    cs = out_score(same_x).reshape(B, -1)
    cd = out_score(diff_x).reshape(B, -1)
    ss = cs @ params["wfc"].T + params["bfc"]
    sd = cd @ params["wfc"].T + params["bfc"]
    lps = jax.nn.log_softmax(ss, axis=1)
    lpd = jax.nn.log_softmax(sd, axis=1)
    return -jnp.mean(lps[:, 1]) - jnp.mean(lpd[:, 0])


if __name__ == "__main__":
    B, dim, H, W = 2, 4, 7, 7  # H=W=7 -> conv output 3x3, matching fc in_features 3*3*128

    key = jax.random.PRNGKey(0)
    k1, k2, k3, k4, k5, k6, kx1, kx2, kp = jax.random.split(key, 9)

    params = {
        "w1": jax.random.normal(k1, (dim, 2 * dim, 3, 3), jnp.float32) * 0.1,
        "b1": jax.random.normal(k2, (dim,), jnp.float32) * 0.1,
        "w2": jax.random.normal(k3, (128, dim, 1, 1), jnp.float32) * 0.1,
        "b2": jax.random.normal(k4, (128,), jnp.float32) * 0.1,
        "wfc": jax.random.normal(k5, (2, 3 * 3 * 128), jnp.float32) * 0.05,
        "bfc": jax.random.normal(k6, (2,), jnp.float32) * 0.05,
    }

    x1 = jax.random.normal(kx1, (B, dim, H, W), jnp.float32)
    x2 = jax.random.normal(kx2, (B, dim, H, W), jnp.float32)
    perm = jax.random.permutation(kp, B)

    loss = jax.jit(club_forward)(x1, x2, perm, params)
    jax.block_until_ready(loss)

    ref = club_reference(x1, x2, perm, params)
    assert jnp.allclose(loss, ref, atol=2e-4, rtol=2e-4), (loss, ref)

    print("KERNEL_OK")
</pallas_src>

<mosaic_0001>
module attributes {stable_mosaic.version = 11 : i64} {
  func.func @club_fused_kernel(%arg0: i32, %arg1: memref<2xi32, #tpu.memory_space<smem>>, %arg2: memref<18x36xf32, #tpu.memory_space<vmem>>, %arg3: memref<18x36xf32, #tpu.memory_space<vmem>>, %arg4: memref<36x4xf32, #tpu.memory_space<vmem>>, %arg5: memref<36x4xf32, #tpu.memory_space<vmem>>, %arg6: memref<1x4xf32, #tpu.memory_space<vmem>>, %arg7: memref<4x128xf32, #tpu.memory_space<vmem>>, %arg8: memref<1x128xf32, #tpu.memory_space<vmem>>, %arg9: memref<36x128xf32, #tpu.memory_space<vmem>>, %arg10: memref<36x128xf32, #tpu.memory_space<vmem>>, %arg11: memref<1x2xf32, #tpu.memory_space<vmem>>, %arg12: memref<1x1xf32, #tpu.memory_space<vmem>>, %arg13: memref<18x4xf32, #tpu.memory_space<vmem>>, %arg14: memref<36x4xf32, #tpu.memory_space<vmem>>) attributes {dimension_semantics = [#tpu.dimension_semantics<arbitrary>], iteration_bounds = array<i64: 1>, scalar_prefetch = 1 : i64, scratch_operands = 2 : i64, tpu.core_type = #tpu.core_type<tc>, window_params = [{pipeline_mode = #tpu.pipeline_mode<synchronous>, transform_indices = @transform_0, window_bounds = array<i64: 18, 36>}, {pipeline_mode = #tpu.pipeline_mode<synchronous>, transform_indices = @transform_1, window_bounds = array<i64: 18, 36>}, {pipeline_mode = #tpu.pipeline_mode<synchronous>, transform_indices = @transform_2, window_bounds = array<i64: 36, 4>}, {pipeline_mode = #tpu.pipeline_mode<synchronous>, transform_indices = @transform_3, window_bounds = array<i64: 36, 4>}, {pipeline_mode = #tpu.pipeline_mode<synchronous>, transform_indices = @transform_4, window_bounds = array<i64: 1, 4>}, {pipeline_mode = #tpu.pipeline_mode<synchronous>, transform_indices = @transform_5, window_bounds = array<i64: 4, 128>}, {pipeline_mode = #tpu.pipeline_mode<synchronous>, transform_indices = @transform_6, window_bounds = array<i64: 1, 128>}, {pipeline_mode = #tpu.pipeline_mode<synchronous>, transform_indices = @transform_7, window_bounds = array<i64: 36, 128>}, {pipeline_mode = #tpu.pipeline_mode<synchronous>, transform_indices = @transform_8, window_bounds = array<i64: 36, 128>}, {pipeline_mode = #tpu.pipeline_mode<synchronous>, transform_indices = @transform_9, window_bounds = array<i64: 1, 2>}, {pipeline_mode = #tpu.pipeline_mode<synchronous>, transform_indices = @transform_10, window_bounds = array<i64: 1, 1>}]} {
    %c0 = arith.constant 0 : index
    %c0_0 = arith.constant 0 : index
    %0 = vector.load %arg2[%c0, %c0_0] : memref<18x36xf32, #tpu.memory_space<vmem>>, vector<18x36xf32>
    %c0_1 = arith.constant 0 : index
    %c0_2 = arith.constant 0 : index
    %1 = vector.load %arg4[%c0_1, %c0_2] : memref<36x4xf32, #tpu.memory_space<vmem>>, vector<36x4xf32>
    %cst = arith.constant dense<0.000000e+00> : vector<18x4xf32>
    %2 = tpu.matmul %0, %1, %cst {dimension_numbers = #tpu.dot_dimension_numbers<[1], [0], [0], [1], [0, 0, 1, 1], [], []>} : vector<18x36xf32>, vector<36x4xf32>, vector<18x4xf32> -> vector<18x4xf32>
    %c0_3 = arith.constant 0 : index
    %c0_4 = arith.constant 0 : index
    %3 = vector.load %arg3[%c0_3, %c0_4] : memref<18x36xf32, #tpu.memory_space<vmem>>, vector<18x36xf32>
    %c0_5 = arith.constant 0 : index
    %c0_6 = arith.constant 0 : index
    %4 = vector.load %arg5[%c0_5, %c0_6] : memref<36x4xf32, #tpu.memory_space<vmem>>, vector<36x4xf32>
    %cst_7 = arith.constant dense<0.000000e+00> : vector<18x4xf32>
    %5 = tpu.matmul %3, %4, %cst_7 {dimension_numbers = #tpu.dot_dimension_numbers<[1], [0], [0], [1], [0, 0, 1, 1], [], []>} : vector<18x36xf32>, vector<36x4xf32>, vector<18x4xf32> -> vector<18x4xf32>
    %c0_8 = arith.constant 0 : index
    %c0_9 = arith.constant 0 : index
    %6 = vector.load %arg13[%c0_8, %c0_9] : memref<18x4xf32, #tpu.memory_space<vmem>>, vector<18x4xf32>
    tpu.vector_store %arg13[%c0_8, %c0_9], %5 {strides = array<i32>} : memref<18x4xf32, #tpu.memory_space<vmem>>, vector<18x4xf32>,
    %7 = arith.addf %2, %5 : vector<18x4xf32>
    %c0_10 = arith.constant 0 : index
    %c0_11 = arith.constant 0 : index
    %8 = vector.load %arg14[%c0_10, %c0_11] : memref<36x4xf32, #tpu.memory_space<vmem>>, vector<18x4xf32>
    tpu.vector_store %arg14[%c0_10, %c0_11], %7 {strides = array<i32>} : memref<36x4xf32, #tpu.memory_space<vmem>>, vector<18x4xf32>,
    %9 = vector.extract_strided_slice %2 {offsets = [0, 0], sizes = [9, 4], strides = [1, 1]} : vector<18x4xf32> to vector<9x4xf32>
    %c0_12 = arith.constant 0 : index
    %10 = memref.load %arg1[%c0_12] : memref<2xi32, #tpu.memory_space<smem>>
    %c9_i32 = arith.constant 9 : i32
    %11 = arith.muli %10, %c9_i32 : i32
    %12 = arith.index_cast %11 : i32 to index
    %c0_13 = arith.constant 0 : index
    %13 = vector.load %arg13[%12, %c0_13] : memref<18x4xf32, #tpu.memory_space<vmem>>, vector<9x4xf32>
    %14 = arith.addf %9, %13 : vector<9x4xf32>
    %c18 = arith.constant 18 : index
    %c0_14 = arith.constant 0 : index
    %15 = vector.load %arg14[%c18, %c0_14] : memref<36x4xf32, #tpu.memory_space<vmem>>, vector<9x4xf32>
    tpu.vector_store %arg14[%c18, %c0_14], %14 {strides = array<i32>} : memref<36x4xf32, #tpu.memory_space<vmem>>, vector<9x4xf32>,
    %16 = vector.extract_strided_slice %2 {offsets = [9, 0], sizes = [9, 4], strides = [1, 1]} : vector<18x4xf32> to vector<9x4xf32>
    %c1 = arith.constant 1 : index
    %17 = memref.load %arg1[%c1] : memref<2xi32, #tpu.memory_space<smem>>
    %c9_i32_15 = arith.constant 9 : i32
    %18 = arith.muli %17, %c9_i32_15 : i32
    %19 = arith.index_cast %18 : i32 to index
    %c0_16 = arith.constant 0 : index
    %20 = vector.load %arg13[%19, %c0_16] : memref<18x4xf32, #tpu.memory_space<vmem>>, vector<9x4xf32>
    %21 = arith.addf %16, %20 : vector<9x4xf32>
    %c27 = arith.constant 27 : index
    %c0_17 = arith.constant 0 : index
    %22 = vector.load %arg14[%c27, %c0_17] : memref<36x4xf32, #tpu.memory_space<vmem>>, vector<9x4xf32>
    tpu.vector_store %arg14[%c27, %c0_17], %21 {strides = array<i32>} : memref<36x4xf32, #tpu.memory_space<vmem>>, vector<9x4xf32>,
    %c0_18 = arith.constant 0 : index
    %c0_19 = arith.constant 0 : index
    %23 = vector.load %arg14[%c0_18, %c0_19] : memref<36x4xf32, #tpu.memory_space<vmem>>, vector<36x4xf32>
    %c0_20 = arith.constant 0 : index
    %c0_21 = arith.constant 0 : index
    %24 = vector.load %arg6[%c0_20, %c0_21] : memref<1x4xf32, #tpu.memory_space<vmem>>, vector<1x4xf32>
    %25 = vector.broadcast %24 : vector<1x4xf32> to vector<36x4xf32>
    %26 = arith.addf %23, %25 : vector<36x4xf32>
    %cst_22 = arith.constant 0.000000e+00 : f32
    %27 = vector.broadcast %cst_22 : f32 to vector<36x4xf32>
    %28 = arith.maximumf %26, %27 : vector<36x4xf32>
    %c0_23 = arith.constant 0 : index
    %c0_24 = arith.constant 0 : index
    %29 = vector.load %arg7[%c0_23, %c0_24] : memref<4x128xf32, #tpu.memory_space<vmem>>, vector<4x128xf32>
    %30 = vector.extract_strided_slice %28 {offsets = [0, 0], sizes = [36, 1], strides = [1, 1]} : vector<36x4xf32> to vector<36x1xf32>
    %31 = vector.extract_strided_slice %29 {offsets = [0, 0], sizes = [1, 128], strides = [1, 1]} : vector<4x128xf32> to vector<1x128xf32>
    %32 = vector.broadcast %30 : vector<36x1xf32> to vector<36x128xf32>
    %33 = vector.broadcast %31 : vector<1x128xf32> to vector<36x128xf32>
    %34 = arith.mulf %32, %33 : vector<36x128xf32>
    %35 = vector.extract_strided_slice %28 {offsets = [0, 1], sizes = [36, 1], strides = [1, 1]} : vector<36x4xf32> to vector<36x1xf32>
    %36 = vector.extract_strided_slice %29 {offsets = [1, 0], sizes = [1, 128], strides = [1, 1]} : vector<4x128xf32> to vector<1x128xf32>
    %37 = vector.broadcast %35 : vector<36x1xf32> to vector<36x128xf32>
    %38 = vector.broadcast %36 : vector<1x128xf32> to vector<36x128xf32>
    %39 = arith.mulf %37, %38 : vector<36x128xf32>
    %40 = arith.addf %34, %39 : vector<36x128xf32>
    %41 = vector.extract_strided_slice %28 {offsets = [0, 2], sizes = [36, 1], strides = [1, 1]} : vector<36x4xf32> to vector<36x1xf32>
    %42 = vector.extract_strided_slice %29 {offsets = [2, 0], sizes = [1, 128], strides = [1, 1]} : vector<4x128xf32> to vector<1x128xf32>
    %43 = vector.broadcast %41 : vector<36x1xf32> to vector<36x128xf32>
    %44 = vector.broadcast %42 : vector<1x128xf32> to vector<36x128xf32>
    %45 = arith.mulf %43, %44 : vector<36x128xf32>
    %46 = arith.addf %40, %45 : vector<36x128xf32>
    %47 = vector.extract_strided_slice %28 {offsets = [0, 3], sizes = [36, 1], strides = [1, 1]} : vector<36x4xf32> to vector<36x1xf32>
    %48 = vector.extract_strided_slice %29 {offsets = [3, 0], sizes = [1, 128], strides = [1, 1]} : vector<4x128xf32> to vector<1x128xf32>
    %49 = vector.broadcast %47 : vector<36x1xf32> to vector<36x128xf32>
    %50 = vector.broadcast %48 : vector<1x128xf32> to vector<36x128xf32>
    %51 = arith.mulf %49, %50 : vector<36x128xf32>
    %52 = arith.addf %46, %51 : vector<36x128xf32>
    %c0_25 = arith.constant 0 : index
    %c0_26 = arith.constant 0 : index
    %53 = vector.load %arg8[%c0_25, %c0_26] : memref<1x128xf32, #tpu.memory_space<vmem>>, vector<1x128xf32>
    %54 = vector.broadcast %53 : vector<1x128xf32> to vector<36x128xf32>
    %55 = arith.addf %52, %54 : vector<36x128xf32>
    %cst_27 = arith.constant 0.000000e+00 : f32
    %56 = vector.broadcast %cst_27 : f32 to vector<36x128xf32>
    %57 = arith.maximumf %55, %56 : vector<36x128xf32>
    %c0_28 = arith.constant 0 : index
    %c0_29 = arith.constant 0 : index
    %58 = vector.load %arg9[%c0_28, %c0_29] : memref<36x128xf32, #tpu.memory_space<vmem>>, vector<36x128xf32>
    %59 = arith.mulf %57, %58 : vector<36x128xf32>
    %cst_30 = arith.constant dense<0.000000e+00> : vector<36xf32>
    %60 = vector.multi_reduction <add>, %59, %cst_30 [1] : vector<36x128xf32> to vector<36xf32>
    %61 = vector.shape_cast %60 : vector<36xf32> to vector<36x1xf32>
    %c0_31 = arith.constant 0 : index
    %c0_32 = arith.constant 0 : index
    %62 = vector.load %arg10[%c0_31, %c0_32] : memref<36x128xf32, #tpu.memory_space<vmem>>, vector<36x128xf32>
    %63 = arith.mulf %57, %62 : vector<36x128xf32>
    %cst_33 = arith.constant dense<0.000000e+00> : vector<36xf32>
    %64 = vector.multi_reduction <add>, %63, %cst_33 [1] : vector<36x128xf32> to vector<36xf32>
    %65 = vector.shape_cast %64 : vector<36xf32> to vector<36x1xf32>
    %66 = tpu.concatenate %61, %65 in 1 : vector<36x1xf32>, vector<36x1xf32> -> vector<36x2xf32>
    %67 = tpu.iota {dimensions = array<i32: 1>} : vector<4x36xi32>
    %68 = tpu.iota {dimensions = array<i32: 0>} : vector<4x36xi32>
    %c9_i32_34 = arith.constant 9 : i32
    %69 = vector.broadcast %c9_i32_34 : i32 to vector<4x36xi32>
    %70 = arith.muli %68, %69 : vector<4x36xi32>
    %71 = arith.cmpi sge, %67, %70 : vector<4x36xi32>
    %c1_i32 = arith.constant 1 : i32
    %72 = vector.broadcast %c1_i32 : i32 to vector<4x36xi32>
    %73 = arith.addi %68, %72 : vector<4x36xi32>
    %c9_i32_35 = arith.constant 9 : i32
    %74 = vector.broadcast %c9_i32_35 : i32 to vector<4x36xi32>
    %75 = arith.muli %73, %74 : vector<4x36xi32>
    %76 = arith.cmpi slt, %67, %75 : vector<4x36xi32>
    %77 = arith.andi %71, %76 : vector<4x36xi1>
    %cst_36 = arith.constant 1.000000e+00 : f32
    %cst_37 = arith.constant 0.000000e+00 : f32
    %78 = vector.broadcast %cst_36 : f32 to vector<4x36xf32>
    %79 = vector.broadcast %cst_37 : f32 to vector<4x36xf32>
    %80 = arith.select %77, %78, %79 : vector<4x36xi1>, vector<4x36xf32>
    %cst_38 = arith.constant dense<0.000000e+00> : vector<4x2xf32>
    %81 = tpu.matmul %80, %66, %cst_38 {dimension_numbers = #tpu.dot_dimension_numbers<[1], [0], [0], [1], [0, 0, 1, 1], [], []>} : vector<4x36xf32>, vector<36x2xf32>, vector<4x2xf32> -> vector<4x2xf32>
    %c0_39 = arith.constant 0 : index
    %c0_40 = arith.constant 0 : index
    %82 = vector.load %arg11[%c0_39, %c0_40] : memref<1x2xf32, #tpu.memory_space<vmem>>, vector<1x2xf32>
    %83 = vector.broadcast %82 : vector<1x2xf32> to vector<4x2xf32>
    %84 = arith.addf %81, %83 : vector<4x2xf32>
    %85 = vector.extract_strided_slice %84 {offsets = [0, 0], sizes = [4, 1], strides = [1, 1]} : vector<4x2xf32> to vector<4x1xf32>
    %86 = vector.extract_strided_slice %84 {offsets = [0, 1], sizes = [4, 1], strides = [1, 1]} : vector<4x2xf32> to vector<4x1xf32>
    %87 = arith.maximumf %85, %86 : vector<4x1xf32>
    %88 = arith.subf %85, %87 : vector<4x1xf32>
    %89 = math.exp %88 : vector<4x1xf32>
    %90 = arith.subf %86, %87 : vector<4x1xf32>
    %91 = math.exp %90 : vector<4x1xf32>
    %92 = arith.addf %89, %91 : vector<4x1xf32>
    %93 = math.log %92 : vector<4x1xf32>
    %94 = arith.addf %87, %93 : vector<4x1xf32>
    %95 = tpu.iota {dimensions = array<i32: 0>} : vector<4x1xi32>
    %c2_i32 = arith.constant 2 : i32
    %96 = vector.broadcast %c2_i32 : i32 to vector<4x1xi32>
    %97 = arith.cmpi slt, %95, %96 : vector<4x1xi32>
    %98 = arith.select %97, %86, %85 : vector<4x1xi1>, vector<4x1xf32>
    %99 = arith.subf %94, %98 : vector<4x1xf32>
    %100 = vector.shape_cast %99 : vector<4x1xf32> to vector<1x4x1xf32>
    %cst_41 = arith.constant dense<0.000000e+00> : vector<1xf32>
    %101 = vector.multi_reduction <add>, %100, %cst_41 [1, 2] : vector<1x4x1xf32> to vector<1xf32>
    %102 = vector.shape_cast %101 : vector<1xf32> to vector<1x1x1xf32>
    %103 = vector.extract %102[0, 0, 0] : f32 from vector<1x1x1xf32>
    %104 = vector.broadcast %103 : f32 to vector<1x1xf32>
    %cst_42 = arith.constant 2.000000e+00 : f32
    %105 = vector.broadcast %cst_42 : f32 to vector<1x1xf32>
    %106 = arith.divf %104, %105 : vector<1x1xf32>
    %c0_43 = arith.constant 0 : index
    %c0_44 = arith.constant 0 : index
    %107 = vector.load %arg12[%c0_43, %c0_44] : memref<1x1xf32, #tpu.memory_space<vmem>>, vector<1x1xf32>
    tpu.vector_store %arg12[%c0_43, %c0_44], %106 {strides = array<i32>} : memref<1x1xf32, #tpu.memory_space<vmem>>, vector<1x1xf32>,
    return
  }
  func.func @transform_0(%arg0: i32, %arg1: memref<2xi32, #tpu.memory_space<smem>>) -> (i32, i32) {
    %c0_i32 = arith.constant 0 : i32
    %c0_i32_0 = arith.constant 0 : i32
    %c0_i32_1 = arith.constant 0 : i32
    return %c0_i32, %c0_i32_0 : i32, i32
  }
  func.func @transform_1(%arg0: i32, %arg1: memref<2xi32, #tpu.memory_space<smem>>) -> (i32, i32) {
    %c0_i32 = arith.constant 0 : i32
    %c0_i32_0 = arith.constant 0 : i32
    %c0_i32_1 = arith.constant 0 : i32
    return %c0_i32, %c0_i32_0 : i32, i32
  }
  func.func @transform_2(%arg0: i32, %arg1: memref<2xi32, #tpu.memory_space<smem>>) -> (i32, i32) {
    %c0_i32 = arith.constant 0 : i32
    %c0_i32_0 = arith.constant 0 : i32
    %c0_i32_1 = arith.constant 0 : i32
    return %c0_i32, %c0_i32_0 : i32, i32
  }
  func.func @transform_3(%arg0: i32, %arg1: memref<2xi32, #tpu.memory_space<smem>>) -> (i32, i32) {
    %c0_i32 = arith.constant 0 : i32
    %c0_i32_0 = arith.constant 0 : i32
    %c0_i32_1 = arith.constant 0 : i32
    return %c0_i32, %c0_i32_0 : i32, i32
  }
  func.func @transform_4(%arg0: i32, %arg1: memref<2xi32, #tpu.memory_space<smem>>) -> (i32, i32) {
    %c0_i32 = arith.constant 0 : i32
    %c0_i32_0 = arith.constant 0 : i32
    %c0_i32_1 = arith.constant 0 : i32
    return %c0_i32, %c0_i32_0 : i32, i32
  }
  func.func @transform_5(%arg0: i32, %arg1: memref<2xi32, #tpu.memory_space<smem>>) -> (i32, i32) {
    %c0_i32 = arith.constant 0 : i32
    %c0_i32_0 = arith.constant 0 : i32
    %c0_i32_1 = arith.constant 0 : i32
    return %c0_i32, %c0_i32_0 : i32, i32
  }
  func.func @transform_6(%arg0: i32, %arg1: memref<2xi32, #tpu.memory_space<smem>>) -> (i32, i32) {
    %c0_i32 = arith.constant 0 : i32
    %c0_i32_0 = arith.constant 0 : i32
    %c0_i32_1 = arith.constant 0 : i32
    return %c0_i32, %c0_i32_0 : i32, i32
  }
  func.func @transform_7(%arg0: i32, %arg1: memref<2xi32, #tpu.memory_space<smem>>) -> (i32, i32) {
    %c0_i32 = arith.constant 0 : i32
    %c0_i32_0 = arith.constant 0 : i32
    %c0_i32_1 = arith.constant 0 : i32
    return %c0_i32, %c0_i32_0 : i32, i32
  }
  func.func @transform_8(%arg0: i32, %arg1: memref<2xi32, #tpu.memory_space<smem>>) -> (i32, i32) {
    %c0_i32 = arith.constant 0 : i32
    %c0_i32_0 = arith.constant 0 : i32
    %c0_i32_1 = arith.constant 0 : i32
    return %c0_i32, %c0_i32_0 : i32, i32
  }
  func.func @transform_9(%arg0: i32, %arg1: memref<2xi32, #tpu.memory_space<smem>>) -> (i32, i32) {
    %c0_i32 = arith.constant 0 : i32
    %c0_i32_0 = arith.constant 0 : i32
    %c0_i32_1 = arith.constant 0 : i32
    return %c0_i32, %c0_i32_0 : i32, i32
  }
  func.func @transform_10(%arg0: i32, %arg1: memref<2xi32, #tpu.memory_space<smem>>) -> (i32, i32) {
    %c0_i32 = arith.constant 0 : i32
    %c0_i32_0 = arith.constant 0 : i32
    %c0_i32_1 = arith.constant 0 : i32
    return %c0_i32, %c0_i32_0 : i32, i32
  }
}

</mosaic_0001>

<llo_original>
// kernel: tile.19
$region0: #{tile.19}
  %s0 = inlined_call_operand.vmem [shape: f32[4,9,128], index: 0, kind: input, shape index: {}]
  %s1 = inlined_call_operand.vmem [shape: f32[36,128], index: 1, kind: output, shape index: {}]
  %v2 = vld [vmem:[%s0] sm:$0xff]
  %3 = vst [vmem:[%s1] sm:$0xff] %v2
  %s4 = scalar_lea.vmem %s0, 8
  %s5 = smov 3
  %v6 = vld [vmem:[%s4] ss:$8 sm:%s5]
  %s7 = scalar_lea.vmem %s1, 8
  %8 = vst [vmem:[%s7] sm:$0x3] %v6
  %s9 = scalar_lea.vmem %s0, 17
  %v10 = vld [vmem:[%s9] sm:$0xff]
  %s11 = scalar_lea.vmem %s1, 10
  %12 = vst [vmem:[%s11] sm:$0xff] %v10
  %s13 = scalar_lea.vmem %s0, 32
  %v14 = vld [vmem:[%s13] sm:$0xff]
  %s15 = scalar_lea.vmem %s1, 18
  %16 = vst [vmem:[%s15] sm:$0xff] %v14
  %s17 = scalar_lea.vmem %s0, 40
  %s18 = smov 3
  %v19 = vld [vmem:[%s17] ss:$8 sm:%s18]
  %s20 = scalar_lea.vmem %s1, 26
  %21 = vst [vmem:[%s20] sm:$0x3] %v19
  %s22 = scalar_lea.vmem %s0, 49
  %v23 = vld [vmem:[%s22] sm:$0xff]
  %s24 = scalar_lea.vmem %s1, 28
  %25 = vst [vmem:[%s24] sm:$0xff] %v23

// kernel: squeeze.3
$region0: #{squeeze.3}
  %s0 = inlined_call_operand.vmem [shape: f32[1152], index: 0, kind: input, shape index: {}]
  %s1 = inlined_call_operand.vmem [shape: f32[128,9], index: 1, kind: output, shape index: {}]
  %v2 = vld [vmem:[%s0] sm:$0x1]
  %vm3 = vcmask 72704
  %4 = vst.msk [vmem:[%s1] sm:$0x1] %vm3, %v2
  %s5 = scalar_lea.vmem %s0, 4
  %v6 = vld [vmem:[%s5] sm:$0x1]
  %7 = vrot.lane.b32.xlu0 %v6, 127
  %v8 = vpop.permute.xlu0 %7
  %vm9 = vcmask 72704
  %s10 = scalar_lea.vmem %s1, 57
  %11 = vst.msk [vmem:[%s10] sm:$0x1] %vm9, %v8
  %s12 = scalar_lea.vmem %s0, 8
  %v13 = vld [vmem:[%s12] sm:$0x1]
  %14 = vrot.lane.b32.xlu0 %v13, 126
  %v15 = vpop.permute.xlu0 %14
  %vm16 = vcmask 72704
  %s17 = scalar_lea.vmem %s1, 114
  %18 = vst.msk [vmem:[%s17] sm:$0x1] %vm16, %v15
  %s19 = scalar_lea.vmem %s0, 3
  %v20 = vld [vmem:[%s19] sm:$0x1]
  %21 = vrot.lane.b32.xlu0 %v20, 125
  %v22 = vpop.permute.xlu0 %21
  %vm23 = vcmask 72704
  %s24 = scalar_lea.vmem %s1, 43
  %25 = vst.msk [vmem:[%s24] sm:$0x1] %vm23, %v22
  %s26 = scalar_lea.vmem %s0, 7
  %v27 = vld [vmem:[%s26] sm:$0x1]
  %28 = vrot.lane.b32.xlu0 %v27, 124
  %v29 = vpop.permute.xlu0 %28
  %vm30 = vcmask 72704
  %s31 = scalar_lea.vmem %s1, 100
  %32 = vst.msk [vmem:[%s31] sm:$0x1] %vm30, %v29
  %s33 = scalar_lea.vmem %s0, 2
  %v34 = vld [vmem:[%s33] sm:$0x1]
  %35 = vrot.lane.b32.xlu0 %v34, 123
  %v36 = vpop.permute.xlu0 %35
  %vm37 = vcmask 72704
  %s38 = scalar_lea.vmem %s1, 29
  %39 = vst.msk [vmem:[%s38] sm:$0x1] %vm37, %v36
  %s40 = scalar_lea.vmem %s0, 6
  %v41 = vld [vmem:[%s40] sm:$0x1]
  %42 = vrot.lane.b32.xlu0 %v41, 122
  %v43 = vpop.permute.xlu0 %42
  %vm44 = vcmask 72704
  %s45 = scalar_lea.vmem %s1, 86
  %46 = vst.msk [vmem:[%s45] sm:$0x1] %vm44, %v43
  %s47 = scalar_lea.vmem %s0, 1
  %v48 = vld [vmem:[%s47] sm:$0x1]
  %49 = vrot.lane.b32.xlu0 %v48, 121
  %v50 = vpop.permute.xlu0 %49
  %vm51 = vcmask 72704
  %s52 = scalar_lea.vmem %s1, 15
  %53 = vst.msk [vmem:[%s52] sm:$0x1] %vm51, %v50
  %s54 = scalar_lea.vmem %s0, 5
  %v55 = vld [vmem:[%s54] sm:$0x1]
  %56 = vrot.lane.b32.xlu0 %v55, 120
  %v57 = vpop.permute.xlu0 %56
  %vm58 = vcmask 72704
  %s59 = scalar_lea.vmem %s1, 72
  %60 = vst.msk [vmem:[%s59] sm:$0x1] %vm58, %v57
  %v61 = vld [vmem:[%s0] sm:$0x1]
  %62 = vrot.lane.b32.xlu0 %v61, 119
  %v63 = vpop.permute.xlu0 %62
  %vm64 = vcmask 72704
  %s65 = scalar_lea.vmem %s1, 1
  %66 = vst.msk [vmem:[%s65] sm:$0x1] %vm64, %v63
  %s67 = scalar_lea.vmem %s0, 4
  %v68 = vld [vmem:[%s67] sm:$0x1]
  %69 = vrot.lane.b32.xlu0 %v68, 118
  %v70 = vpop.permute.xlu0 %69
  %vm71 = vcmask 72704
  %s72 = scalar_lea.vmem %s1, 58
  %73 = vst.msk [vmem:[%s72] sm:$0x1] %vm71, %v70
  %s74 = scalar_lea.vmem %s0, 8
  %v75 = vld [vmem:[%s74] sm:$0x1]
  %76 = vrot.lane.b32.xlu0 %v75, 117
  %v77 = vpop.permute.xlu0 %76
  %vm78 = vcmask 72704
  %s79 = scalar_lea.vmem %s1, 115
  %80 = vst.msk [vmem:[%s79] sm:$0x1] %vm78, %v77
  %s81 = scalar_lea.vmem %s0, 3
  %v82 = vld [vmem:[%s81] sm:$0x1]
  %83 = vrot.lane.b32.xlu0 %v82, 116
  %v84 = vpop.permute.xlu0 %83
  %vm85 = vcmask 72704
  %s86 = scalar_lea.vmem %s1, 44
  %87 = vst.msk [vmem:[%s86] sm:$0x1] %vm85, %v84
  %s88 = scalar_lea.vmem %s0, 7
  %v89 = vld [vmem:[%s88] sm:$0x1]
  %90 = vrot.lane.b32.xlu0 %v89, 115
  %v91 = vpop.permute.xlu0 %90
  %vm92 = vcmask 72704
  %s93 = scalar_lea.vmem %s1, 101
  %94 = vst.msk [vmem:[%s93] sm:$0x1] %vm92, %v91
  %s95 = scalar_lea.vmem %s0, 2
  %v96 = vld [vmem:[%s95] sm:$0x1]
  %97 = vrot.lane.b32.xlu0 %v96, 114
  %v98 = vpop.permute.xlu0 %97
  %vm99 = vcmask 72704
  %s100 = scalar_lea.vmem %s1, 30
  %101 = vst.msk [vmem:[%s100] sm:$0x1] %vm99, %v98
  %s102 = scalar_lea.vmem %s0, 6
  %v103 = vld [vmem:[%s102] sm:$0x1]
  %104 = vrot.lane.b32.xlu0 %v103, 113
  %v105 = vpop.permute.xlu0 %104
  %vm106 = vcmask 72704
  %s107 = scalar_lea.vmem %s1, 87
  %108 = vst.msk [vmem:[%s107] sm:$0x1] %vm106, %v105
  %s109 = scalar_lea.vmem %s0, 1
  %v110 = vld [vmem:[%s109] sm:$0x1]
  %111 = vrot.lane.b32.xlu0 %v110, 112
  %v112 = vpop.permute.xlu0 %111
  %vm113 = vcmask 72704
  %s114 = scalar_lea.vmem %s1, 16
  %115 = vst.msk [vmem:[%s114] sm:$0x1] %vm113, %v112
  %s116 = scalar_lea.vmem %s0, 5
  %v117 = vld [vmem:[%s116] sm:$0x1]
  %118 = vrot.lane.b32.xlu0 %v117, 111
  %v119 = vpop.permute.xlu0 %118
  %vm120 = vcmask 72704
  %s121 = scalar_lea.vmem %s1, 73
  %122 = vst.msk [vmem:[%s121] sm:$0x1] %vm120, %v119
  %v123 = vld [vmem:[%s0] sm:$0x1]
  %124 = vrot.lane.b32.xlu0 %v123, 110
  %v125 = vpop.permute.xlu0 %124
  %vm126 = vcmask 72704
  %s127 = scalar_lea.vmem %s1, 2
  %128 = vst.msk [vmem:[%s127] sm:$0x1] %vm126, %v125
  %s129 = scalar_lea.vmem %s0, 4
  %v130 = vld [vmem:[%s129] sm:$0x1]
  %131 = vrot.lane.b32.xlu0 %v130, 109
  %v132 = vpop.permute.xlu0 %131
  %vm133 = vcmask 72704
  %s134 = scalar_lea.vmem %s1, 59
  %135 = vst.msk [vmem:[%s134] sm:$0x1] %vm133, %v132
  %s136 = scalar_lea.vmem %s0, 8
  %v137 = vld [vmem:[%s136] sm:$0x1]
  %138 = vrot.lane.b32.xlu0 %v137, 108
  %v139 = vpop.permute.xlu0 %138
  %vm140 = vcmask 72704
  %s141 = scalar_lea.vmem %s1, 116
  %142 = vst.msk [vmem:[%s141] sm:$0x1] %vm140, %v139
  %s143 = scalar_lea.vmem %s0, 3
  %v144 = vld [vmem:[%s143] sm:$0x1]
  %145 = vrot.lane.b32.xlu0 %v144, 107
  %v146 = vpop.permute.xlu0 %145
  %vm147 = vcmask 72704
  %s148 = scalar_lea.vmem %s1, 45
  %149 = vst.msk [vmem:[%s148] sm:$0x1] %vm147, %v146
  %s150 = scalar_lea.vmem %s0, 7
  %v151 = vld [vmem:[%s150] sm:$0x1]
  %152 = vrot.lane.b32.xlu0 %v151, 106
  %v153 = vpop.permute.xlu0 %152
  %vm154 = vcmask 72704
  %s155 = scalar_lea.vmem %s1, 102
  %156 = vst.msk [vmem:[%s155] sm:$0x1] %vm154, %v153
  %s157 = scalar_lea.vmem %s0, 2
  %v158 = vld [vmem:[%s157] sm:$0x1]
  %159 = vrot.lane.b32.xlu0 %v158, 105
  %v160 = vpop.permute.xlu0 %159
  %vm161 = vcmask 72704
  %s162 = scalar_lea.vmem %s1, 31
  %163 = vst.msk [vmem:[%s162] sm:$0x1] %vm161, %v160
  %s164 = scalar_lea.vmem %s0, 6
  %v165 = vld [vmem:[%s164] sm:$0x1]
  %166 = vrot.lane.b32.xlu0 %v165, 104
  %v167 = vpop.permute.xlu0 %166
  %vm168 = vcmask 72704
  %s169 = scalar_lea.vmem %s1, 88
  %170 = vst.msk [vmem:[%s169] sm:$0x1] %vm168, %v167
  %s171 = scalar_lea.vmem %s0, 1
  %v172 = vld [vmem:[%s171] sm:$0x1]
  %173 = vrot.lane.b32.xlu0 %v172, 103
  %v174 = vpop.permute.xlu0 %173
  %vm175 = vcmask 72704
  %s176 = scalar_lea.vmem %s1, 17
  %177 = vst.msk [vmem:[%s176] sm:$0x1] %vm175, %v174
  %s178 = scalar_lea.vmem %s0, 5
  %v179 = vld [vmem:[%s178] sm:$0x1]
  %180 = vrot.lane.b32.xlu0 %v179, 102
  %v181 = vpop.permute.xlu0 %180
  %vm182 = vcmask 72704
  %s183 = scalar_lea.vmem %s1, 74
  %184 = vst.msk [vmem:[%s183] sm:$0x1] %vm182, %v181
  %v185 = vld [vmem:[%s0] sm:$0x1]
  %186 = vrot.lane.b32.xlu0 %v185, 101
  %v187 = vpop.permute.xlu0 %186
  %vm188 = vcmask 72704
  %s189 = scalar_lea.vmem %s1, 3
  %190 = vst.msk [vmem:[%s189] sm:$0x1] %vm188, %v187
  %s191 = scalar_lea.vmem %s0, 4
  %v192 = vld [vmem:[%s191] sm:$0x1]
  %193 = vrot.lane.b32.xlu0 %v192, 100
  %v194 = vpop.permute.xlu0 %193
  %vm195 = vcmask 72704
  %s196 = scalar_lea.vmem %s1, 60
  %197 = vst.msk [vmem:[%s196] sm:$0x1] %vm195, %v194
  %s198 = scalar_lea.vmem %s0, 8
  %v199 = vld [vmem:[%s198] sm:$0x1]
  %200 = vrot.lane.b32.xlu0 %v199, 99
  %v201 = vpop.permute.xlu0 %200
  %vm202 = vcmask 72704
  %s203 = scalar_lea.vmem %s1, 117
  %204 = vst.msk [vmem:[%s203] sm:$0x1] %vm202, %v201
  %s205 = scalar_lea.vmem %s0, 3
  %v206 = vld [vmem:[%s205] sm:$0x1]
  %207 = vrot.lane.b32.xlu0 %v206, 98
  %v208 = vpop.permute.xlu0 %207
  %vm209 = vcmask 72704
  %s210 = scalar_lea.vmem %s1, 46
  %211 = vst.msk [vmem:[%s210] sm:$0x1] %vm209, %v208
  %s212 = scalar_lea.vmem %s0, 7
  %v213 = vld [vmem:[%s212] sm:$0x1]
  %214 = vrot.lane.b32.xlu0 %v213, 97
  %v215 = vpop.permute.xlu0 %214
  %vm216 = vcmask 72704
  %s217 = scalar_lea.vmem %s1, 103
  %218 = vst.msk [vmem:[%s217] sm:$0x1] %vm216, %v215
  %s219 = scalar_lea.vmem %s0, 2
  %v220 = vld [vmem:[%s219] sm:$0x1]
  %221 = vrot.lane.b32.xlu0 %v220, 96
  %v222 = vpop.permute.xlu0 %221
  %vm223 = vcmask 72704
  %s224 = scalar_lea.vmem %s1, 32
  %225 = vst.msk [vmem:[%s224] sm:$0x1] %vm223, %v222
  %s226 = scalar_lea.vmem %s0, 6
  %v227 = vld [vmem:[%s226] sm:$0x1]
  %228 = vrot.lane.b32.xlu0 %v227, 95
  %v229 = vpop.permute.xlu0 %228
  %vm230 = vcmask 72704
  %s231 = scalar_lea.vmem %s1, 89
  %232 = vst.msk [vmem:[%s231] sm:$0x1] %vm230, %v229
  %s233 = scalar_lea.vmem %s0, 1
  %v234 = vld [vmem:[%s233] sm:$0x1]
  %235 = vrot.lane.b32.xlu0 %v234, 94
  %v236 = vpop.permute.xlu0 %235
  %vm237 = vcmask 72704
  %s238 = scalar_lea.vmem %s1, 18
  %239 = vst.msk [vmem:[%s238] sm:$0x1] %vm237, %v236
  %s240 = scalar_lea.vmem %s0, 5
  %v241 = vld [vmem:[%s240] sm:$0x1]
  %242 = vrot.lane.b32.xlu0 %v241, 93
  %v243 = vpop.permute.xlu0 %242
  %vm244 = vcmask 72704
  %s245 = scalar_lea.vmem %s1, 75
  %246 = vst.msk [vmem:[%s245] sm:$0x1] %vm244, %v243
  %v247 = vld [vmem:[%s0] sm:$0x1]
  %248 = vrot.lane.b32.xlu0 %v247, 92
  %v249 = vpop.permute.xlu0 %248
  %vm250 = vcmask 72704
  %s251 = scalar_lea.vmem %s1, 4
  %252 = vst.msk [vmem:[%s251] sm:$0x1] %vm250, %v249
  %s253 = scalar_lea.vmem %s0, 4
  %v254 = vld [vmem:[%s253] sm:$0x1]
  %255 = vrot.lane.b32.xlu0 %v254, 91
  %v256 = vpop.permute.xlu0 %255
  %vm257 = vcmask 72704
  %s258 = scalar_lea.vmem %s1, 61
  %259 = vst.msk [vmem:[%s258] sm:$0x1] %vm257, %v256
  %s260 = scalar_lea.vmem %s0, 8
  %v261 = vld [vmem:[%s260] sm:$0x1]
  %262 = vrot.lane.b32.xlu0 %v261, 90
  %v263 = vpop.permute.xlu0 %262
  %vm264 = vcmask 72704
  %s265 = scalar_lea.vmem %s1, 118
  %266 = vst.msk [vmem:[%s265] sm:$0x1] %vm264, %v263
  %s267 = scalar_lea.vmem %s0, 3
  %v268 = vld [vmem:[%s267] sm:$0x1]
  %269 = vrot.lane.b32.xlu0 %v268, 89
  %v270 = vpop.permute.xlu0 %269
  %vm271 = vcmask 72704
  %s272 = scalar_lea.vmem %s1, 47
  %273 = vst.msk [vmem:[%s272] sm:$0x1] %vm271, %v270
  %s274 = scalar_lea.vmem %s0, 7
  %v275 = vld [vmem:[%s274] sm:$0x1]
  %276 = vrot.lane.b32.xlu0 %v275, 88
  %v277 = vpop.permute.xlu0 %276
  %vm278 = vcmask 72704
  %s279 = scalar_lea.vmem %s1, 104
  %280 = vst.msk [vmem:[%s279] sm:$0x1] %vm278, %v277
  %s281 = scalar_lea.vmem %s0, 2
  %v282 = vld [vmem:[%s281] sm:$0x1]
  %283 = vrot.lane.b32.xlu0 %v282, 87
  %v284 = vpop.permute.xlu0 %283
  %vm285 = vcmask 72704
  %s286 = scalar_lea.vmem %s1, 33
  %287 = vst.msk [vmem:[%s286] sm:$0x1] %vm285, %v284
  %s288 = scalar_lea.vmem %s0, 6
  %v289 = vld [vmem:[%s288] sm:$0x1]
  %290 = vrot.lane.b32.xlu0 %v289, 86
  %v291 = vpop.permute.xlu0 %290
  %vm292 = vcmask 72704
  %s293 = scalar_lea.vmem %s1, 90
  %294 = vst.msk [vmem:[%s293] sm:$0x1] %vm292, %v291
  %s295 = scalar_lea.vmem %s0, 1
  %v296 = vld [vmem:[%s295] sm:$0x1]
  %297 = vrot.lane.b32.xlu0 %v296, 85
  %v298 = vpop.permute.xlu0 %297
  %vm299 = vcmask 72704
  %s300 = scalar_lea.vmem %s1, 19
  %301 = vst.msk [vmem:[%s300] sm:$0x1] %vm299, %v298
  %s302 = scalar_lea.vmem %s0, 5
  %v303 = vld [vmem:[%s302] sm:$0x1]
  %304 = vrot.lane.b32.xlu0 %v303, 84
  %v305 = vpop.permute.xlu0 %304
  %vm306 = vcmask 72704
  %s307 = scalar_lea.vmem %s1, 76
  %308 = vst.msk [vmem:[%s307] sm:$0x1] %vm306, %v305
  %v309 = vld [vmem:[%s0] sm:$0x1]
  %310 = vrot.lane.b32.xlu0 %v309, 83
  %v311 = vpop.permute.xlu0 %310
  %vm312 = vcmask 72704
  %s313 = scalar_lea.vmem %s1, 5
  %314 = vst.msk [vmem:[%s313] sm:$0x1] %vm312, %v311
  %s315 = scalar_lea.vmem %s0, 4
  %v316 = vld [vmem:[%s315] sm:$0x1]
  %317 = vrot.lane.b32.xlu0 %v316, 82
  %v318 = vpop.permute.xlu0 %317
  %vm319 = vcmask 72704
  %s320 = scalar_lea.vmem %s1, 62
  %321 = vst.msk [vmem:[%s320] sm:$0x1] %vm319, %v318
  %s322 = scalar_lea.vmem %s0, 8
  %v323 = vld [vmem:[%s322] sm:$0x1]
  %324 = vrot.lane.b32.xlu0 %v323, 81
  %v325 = vpop.permute.xlu0 %324
  %vm326 = vcmask 72704
  %s327 = scalar_lea.vmem %s1, 119
  %328 = vst.msk [vmem:[%s327] sm:$0x1] %vm326, %v325
  %s329 = scalar_lea.vmem %s0, 3
  %v330 = vld [vmem:[%s329] sm:$0x1]
  %331 = vrot.lane.b32.xlu0 %v330, 80
  %v332 = vpop.permute.xlu0 %331
  %vm333 = vcmask 72704
  %s334 = scalar_lea.vmem %s1, 48
  %335 = vst.msk [vmem:[%s334] sm:$0x1] %vm333, %v332
  %s336 = scalar_lea.vmem %s0, 7
  %v337 = vld [vmem:[%s336] sm:$0x1]
  %338 = vrot.lane.b32.xlu0 %v337, 79
  %v339 = vpop.permute.xlu0 %338
  %vm340 = vcmask 72704
  %s341 = scalar_lea.vmem %s1, 105
  %342 = vst.msk [vmem:[%s341] sm:$0x1] %vm340, %v339
  %s343 = scalar_lea.vmem %s0, 2
  %v344 = vld [vmem:[%s343] sm:$0x1]
  %345 = vrot.lane.b32.xlu0 %v344, 78
  %v346 = vpop.permute.xlu0 %345
  %vm347 = vcmask 72704
  %s348 = scalar_lea.vmem %s1, 34
  %349 = vst.msk [vmem:[%s348] sm:$0x1] %vm347, %v346
  %s350 = scalar_lea.vmem %s0, 6
  %v351 = vld [vmem:[%s350] sm:$0x1]
  %352 = vrot.lane.b32.xlu0 %v351, 77
  %v353 = vpop.permute.xlu0 %352
  %vm354 = vcmask 72704
  %s355 = scalar_lea.vmem %s1, 91
  %356 = vst.msk [vmem:[%s355] sm:$0x1] %vm354, %v353
  %s357 = scalar_lea.vmem %s0, 1
  %v358 = vld [vmem:[%s357] sm:$0x1]
  %359 = vrot.lane.b32.xlu0 %v358, 76
  %v360 = vpop.permute.xlu0 %359
  %vm361 = vcmask 72704
  %s362 = scalar_lea.vmem %s1, 20
  %363 = vst.msk [vmem:[%s362] sm:$0x1] %vm361, %v360
  %s364 = scalar_lea.vmem %s0, 5
  %v365 = vld [vmem:[%s364] sm:$0x1]
  %366 = vrot.lane.b32.xlu0 %v365, 75
  %v367 = vpop.permute.xlu0 %366
  %vm368 = vcmask 72704
  %s369 = scalar_lea.vmem %s1, 77
  %370 = vst.msk [vmem:[%s369] sm:$0x1] %vm368, %v367
  %v371 = vld [vmem:[%s0] sm:$0x1]
  %372 = vrot.lane.b32.xlu0 %v371, 74
  %v373 = vpop.permute.xlu0 %372
  %vm374 = vcmask 72704
  %s375 = scalar_lea.vmem %s1, 6
  %376 = vst.msk [vmem:[%s375] sm:$0x1] %vm374, %v373
  %s377 = scalar_lea.vmem %s0, 4
  %v378 = vld [vmem:[%s377] sm:$0x1]
  %379 = vrot.lane.b32.xlu0 %v378, 73
  %v380 = vpop.permute.xlu0 %379
  %vm381 = vcmask 72704
  %s382 = scalar_lea.vmem %s1, 63
  %383 = vst.msk [vmem:[%s382] sm:$0x1] %vm381, %v380
  %s384 = scalar_lea.vmem %s0, 8
  %v385 = vld [vmem:[%s384] sm:$0x1]
  %386 = vrot.lane.b32.xlu0 %v385, 72
  %v387 = vpop.permute.xlu0 %386
  %vm388 = vcmask 72704
  %s389 = scalar_lea.vmem %s1, 120
  %390 = vst.msk [vmem:[%s389] sm:$0x1] %vm388, %v387
  %s391 = scalar_lea.vmem %s0, 3
  %v392 = vld [vmem:[%s391] sm:$0x1]
  %393 = vrot.lane.b32.xlu0 %v392, 71
  %v394 = vpop.permute.xlu0 %393
  %vm395 = vcmask 72704
  %s396 = scalar_lea.vmem %s1, 49
  %397 = vst.msk [vmem:[%s396] sm:$0x1] %vm395, %v394
  %s398 = scalar_lea.vmem %s0, 7
  %v399 = vld [vmem:[%s398] sm:$0x1]
  %400 = vrot.lane.b32.xlu0 %v399, 70
  %v401 = vpop.permute.xlu0 %400
  %vm402 = vcmask 72704
  %s403 = scalar_lea.vmem %s1, 106
  %404 = vst.msk [vmem:[%s403] sm:$0x1] %vm402, %v401
  %s405 = scalar_lea.vmem %s0, 2
  %v406 = vld [vmem:[%s405] sm:$0x1]
  %407 = vrot.lane.b32.xlu0 %v406, 69
  %v408 = vpop.permute.xlu0 %407
  %vm409 = vcmask 72704
  %s410 = scalar_lea.vmem %s1, 35
  %411 = vst.msk [vmem:[%s410] sm:$0x1] %vm409, %v408
  %s412 = scalar_lea.vmem %s0, 6
  %v413 = vld [vmem:[%s412] sm:$0x1]
  %414 = vrot.lane.b32.xlu0 %v413, 68
  %v415 = vpop.permute.xlu0 %414
  %vm416 = vcmask 72704
  %s417 = scalar_lea.vmem %s1, 92
  %418 = vst.msk [vmem:[%s417] sm:$0x1] %vm416, %v415
  %s419 = scalar_lea.vmem %s0, 1
  %v420 = vld [vmem:[%s419] sm:$0x1]
  %421 = vrot.lane.b32.xlu0 %v420, 67
  %v422 = vpop.permute.xlu0 %421
  %vm423 = vcmask 72704
  %s424 = scalar_lea.vmem %s1, 21
  %425 = vst.msk [vmem:[%s424] sm:$0x1] %vm423, %v422
  %s426 = scalar_lea.vmem %s0, 5
  %v427 = vld [vmem:[%s426] sm:$0x1]
  %428 = vrot.lane.b32.xlu0 %v427, 66
  %v429 = vpop.permute.xlu0 %428
  %vm430 = vcmask 72704
  %s431 = scalar_lea.vmem %s1, 78
  %432 = vst.msk [vmem:[%s431] sm:$0x1] %vm430, %v429
  %v433 = vld [vmem:[%s0] sm:$0x1]
  %434 = vrot.lane.b32.xlu0 %v433, 65
  %v435 = vpop.permute.xlu0 %434
  %vm436 = vcmask 72704
  %s437 = scalar_lea.vmem %s1, 7
  %438 = vst.msk [vmem:[%s437] sm:$0x1] %vm436, %v435
  %s439 = scalar_lea.vmem %s0, 4
  %v440 = vld [vmem:[%s439] sm:$0x1]
  %441 = vrot.lane.b32.xlu0 %v440, 64
  %v442 = vpop.permute.xlu0 %441
  %vm443 = vcmask 72704
  %s444 = scalar_lea.vmem %s1, 64
  %445 = vst.msk [vmem:[%s444] sm:$0x1] %vm443, %v442
  %s446 = scalar_lea.vmem %s0, 8
  %v447 = vld [vmem:[%s446] sm:$0x1]
  %448 = vrot.lane.b32.xlu0 %v447, 63
  %v449 = vpop.permute.xlu0 %448
  %vm450 = vcmask 72704
  %s451 = scalar_lea.vmem %s1, 121
  %452 = vst.msk [vmem:[%s451] sm:$0x1] %vm450, %v449
  %s453 = scalar_lea.vmem %s0, 3
  %v454 = vld [vmem:[%s453] sm:$0x1]
  %455 = vrot.lane.b32.xlu0 %v454, 62
  %v456 = vpop.permute.xlu0 %455
  %vm457 = vcmask 72704
  %s458 = scalar_lea.vmem %s1, 50
  %459 = vst.msk [vmem:[%s458] sm:$0x1] %vm457, %v456
  %s460 = scalar_lea.vmem %s0, 7
  %v461 = vld [vmem:[%s460] sm:$0x1]
  %462 = vrot.lane.b32.xlu0 %v461, 61
  %v463 = vpop.permute.xlu0 %462
  %vm464 = vcmask 72704
  %s465 = scalar_lea.vmem %s1, 107
  %466 = vst.msk [vmem:[%s465] sm:$0x1] %vm464, %v463
  %s467 = scalar_lea.vmem %s0, 2
  %v468 = vld [vmem:[%s467] sm:$0x1]
  %469 = vrot.lane.b32.xlu0 %v468, 60
  %v470 = vpop.permute.xlu0 %469
  %vm471 = vcmask 72704
  %s472 = scalar_lea.vmem %s1, 36
  %473 = vst.msk [vmem:[%s472] sm:$0x1] %vm471, %v470
  %s474 = scalar_lea.vmem %s0, 6
  %v475 = vld [vmem:[%s474] sm:$0x1]
  %476 = vrot.lane.b32.xlu0 %v475, 59
  %v477 = vpop.permute.xlu0 %476
  %vm478 = vcmask 72704
  %s479 = scalar_lea.vmem %s1, 93
  %480 = vst.msk [vmem:[%s479] sm:$0x1] %vm478, %v477
  %s481 = scalar_lea.vmem %s0, 1
  %v482 = vld [vmem:[%s481] sm:$0x1]
  %483 = vrot.lane.b32.xlu0 %v482, 58
  %v484 = vpop.permute.xlu0 %483
  %vm485 = vcmask 72704
  %s486 = scalar_lea.vmem %s1, 22
  %487 = vst.msk [vmem:[%s486] sm:$0x1] %vm485, %v484
  %s488 = scalar_lea.vmem %s0, 5
  %v489 = vld [vmem:[%s488] sm:$0x1]
  %490 = vrot.lane.b32.xlu0 %v489, 57
  %v491 = vpop.permute.xlu0 %490
  %vm492 = vcmask 72704
  %s493 = scalar_lea.vmem %s1, 79
  %494 = vst.msk [vmem:[%s493] sm:$0x1] %vm492, %v491
  %v495 = vld [vmem:[%s0] sm:$0x1]
  %496 = vrot.lane.b32.xlu0 %v495, 56
  %v497 = vpop.permute.xlu0 %496
  %vm498 = vcmask 72704
  %s499 = scalar_lea.vmem %s1, 8
  %500 = vst.msk [vmem:[%s499] sm:$0x1] %vm498, %v497
  %s501 = scalar_lea.vmem %s0, 4
  %v502 = vld [vmem:[%s501] sm:$0x1]
  %503 = vrot.lane.b32.xlu0 %v502, 55
  %v504 = vpop.permute.xlu0 %503
  %vm505 = vcmask 72704
  %s506 = scalar_lea.vmem %s1, 65
  %507 = vst.msk [vmem:[%s506] sm:$0x1] %vm505, %v504
  %s508 = scalar_lea.vmem %s0, 8
  %v509 = vld [vmem:[%s508] sm:$0x1]
  %510 = vrot.lane.b32.xlu0 %v509, 54
  %v511 = vpop.permute.xlu0 %510
  %vm512 = vcmask 72704
  %s513 = scalar_lea.vmem %s1, 122
  %514 = vst.msk [vmem:[%s513] sm:$0x1] %vm512, %v511
  %s515 = scalar_lea.vmem %s0, 3
  %v516 = vld [vmem:[%s515] sm:$0x1]
  %517 = vrot.lane.b32.xlu0 %v516, 53
  %v518 = vpop.permute.xlu0 %517
  %vm519 = vcmask 72704
  %s520 = scalar_lea.vmem %s1, 51
  %521 = vst.msk [vmem:[%s520] sm:$0x1] %vm519, %v518
  %s522 = scalar_lea.vmem %s0, 7
  %v523 = vld [vmem:[%s522] sm:$0x1]
  %524 = vrot.lane.b32.xlu0 %v523, 52
  %v525 = vpop.permute.xlu0 %524
  %vm526 = vcmask 72704
  %s527 = scalar_lea.vmem %s1, 108
  %528 = vst.msk [vmem:[%s527] sm:$0x1] %vm526, %v525
  %s529 = scalar_lea.vmem %s0, 2
  %v530 = vld [vmem:[%s529] sm:$0x1]
  %531 = vrot.lane.b32.xlu0 %v530, 51
  %v532 = vpop.permute.xlu0 %531
  %vm533 = vcmask 72704
  %s534 = scalar_lea.vmem %s1, 37
  %535 = vst.msk [vmem:[%s534] sm:$0x1] %vm533, %v532
  %s536 = scalar_lea.vmem %s0, 6
  %v537 = vld [vmem:[%s536] sm:$0x1]
  %538 = vrot.lane.b32.xlu0 %v537, 50
  %v539 = vpop.permute.xlu0 %538
  %vm540 = vcmask 72704
  %s541 = scalar_lea.vmem %s1, 94
  %542 = vst.msk [vmem:[%s541] sm:$0x1] %vm540, %v539
  %s543 = scalar_lea.vmem %s0, 1
  %v544 = vld [vmem:[%s543] sm:$0x1]
  %545 = vrot.lane.b32.xlu0 %v544, 49
  %v546 = vpop.permute.xlu0 %545
  %vm547 = vcmask 72704
  %s548 = scalar_lea.vmem %s1, 23
  %549 = vst.msk [vmem:[%s548] sm:$0x1] %vm547, %v546
  %s550 = scalar_lea.vmem %s0, 5
  %v551 = vld [vmem:[%s550] sm:$0x1]
  %552 = vrot.lane.b32.xlu0 %v551, 48
  %v553 = vpop.permute.xlu0 %552
  %vm554 = vcmask 72704
  %s555 = scalar_lea.vmem %s1, 80
  %556 = vst.msk [vmem:[%s555] sm:$0x1] %vm554, %v553
  %v557 = vld [vmem:[%s0] sm:$0x1]
  %558 = vrot.lane.b32.xlu0 %v557, 47
  %v559 = vpop.permute.xlu0 %558
  %vm560 = vcmask 72704
  %s561 = scalar_lea.vmem %s1, 9
  %562 = vst.msk [vmem:[%s561] sm:$0x1] %vm560, %v559
  %s563 = scalar_lea.vmem %s0, 4
  %v564 = vld [vmem:[%s563] sm:$0x1]
  %565 = vrot.lane.b32.xlu0 %v564, 46
  %v566 = vpop.permute.xlu0 %565
  %vm567 = vcmask 72704
  %s568 = scalar_lea.vmem %s1, 66
  %569 = vst.msk [vmem:[%s568] sm:$0x1] %vm567, %v566
  %s570 = scalar_lea.vmem %s0, 8
  %v571 = vld [vmem:[%s570] sm:$0x1]
  %572 = vrot.lane.b32.xlu0 %v571, 45
  %v573 = vpop.permute.xlu0 %572
  %vm574 = vcmask 72704
  %s575 = scalar_lea.vmem %s1, 123
  %576 = vst.msk [vmem:[%s575] sm:$0x1] %vm574, %v573
  %s577 = scalar_lea.vmem %s0, 3
  %v578 = vld [vmem:[%s577] sm:$0x1]
  %579 = vrot.lane.b32.xlu0 %v578, 44
  %v580 = vpop.permute.xlu0 %579
  %vm581 = vcmask 72704
  %s582 = scalar_lea.vmem %s1, 52
  %583 = vst.msk [vmem:[%s582] sm:$0x1] %vm581, %v580
  %s584 = scalar_lea.vmem %s0, 7
  %v585 = vld [vmem:[%s584] sm:$0x1]
  %586 = vrot.lane.b32.xlu0 %v585, 43
  %v587 = vpop.permute.xlu0 %586
  %vm588 = vcmask 72704
  %s589 = scalar_lea.vmem %s1, 109
  %590 = vst.msk [vmem:[%s589] sm:$0x1] %vm588, %v587
  %s591 = scalar_lea.vmem %s0, 2
  %v592 = vld [vmem:[%s591] sm:$0x1]
  %593 = vrot.lane.b32.xlu0 %v592, 42
  %v594 = vpop.permute.xlu0 %593
  %vm595 = vcmask 72704
  %s596 = scalar_lea.vmem %s1, 38
  %597 = vst.msk [vmem:[%s596] sm:$0x1] %vm595, %v594
  %s598 = scalar_lea.vmem %s0, 6
  %v599 = vld [vmem:[%s598] sm:$0x1]
  %600 = vrot.lane.b32.xlu0 %v599, 41
  %v601 = vpop.permute.xlu0 %600
  %vm602 = vcmask 72704
  %s603 = scalar_lea.vmem %s1, 95
  %604 = vst.msk [vmem:[%s603] sm:$0x1] %vm602, %v601
  %s605 = scalar_lea.vmem %s0, 1
  %v606 = vld [vmem:[%s605] sm:$0x1]
  %607 = vrot.lane.b32.xlu0 %v606, 40
  %v608 = vpop.permute.xlu0 %607
  %vm609 = vcmask 72704
  %s610 = scalar_lea.vmem %s1, 24
  %611 = vst.msk [vmem:[%s610] sm:$0x1] %vm609, %v608
  %s612 = scalar_lea.vmem %s0, 5
  %v613 = vld [vmem:[%s612] sm:$0x1]
  %614 = vrot.lane.b32.xlu0 %v613, 39
  %v615 = vpop.permute.xlu0 %614
  %vm616 = vcmask 72704
  %s617 = scalar_lea.vmem %s1, 81
  %618 = vst.msk [vmem:[%s617] sm:$0x1] %vm616, %v615
  %v619 = vld [vmem:[%s0] sm:$0x1]
  %620 = vrot.lane.b32.xlu0 %v619, 38
  %v621 = vpop.permute.xlu0 %620
  %vm622 = vcmask 72704
  %s623 = scalar_lea.vmem %s1, 10
  %624 = vst.msk [vmem:[%s623] sm:$0x1] %vm622, %v621
  %s625 = scalar_lea.vmem %s0, 4
  %v626 = vld [vmem:[%s625] sm:$0x1]
  %627 = vrot.lane.b32.xlu0 %v626, 37
  %v628 = vpop.permute.xlu0 %627
  %vm629 = vcmask 72704
  %s630 = scalar_lea.vmem %s1, 67
  %631 = vst.msk [vmem:[%s630] sm:$0x1] %vm629, %v628
  %s632 = scalar_lea.vmem %s0, 8
  %v633 = vld [vmem:[%s632] sm:$0x1]
  %634 = vrot.lane.b32.xlu0 %v633, 36
  %v635 = vpop.permute.xlu0 %634
  %vm636 = vcmask 72704
  %s637 = scalar_lea.vmem %s1, 124
  %638 = vst.msk [vmem:[%s637] sm:$0x1] %vm636, %v635
  %s639 = scalar_lea.vmem %s0, 3
  %v640 = vld [vmem:[%s639] sm:$0x1]
  %641 = vrot.lane.b32.xlu0 %v640, 35
  %v642 = vpop.permute.xlu0 %641
  %vm643 = vcmask 72704
  %s644 = scalar_lea.vmem %s1, 53
  %645 = vst.msk [vmem:[%s644] sm:$0x1] %vm643, %v642
  %s646 = scalar_lea.vmem %s0, 7
  %v647 = vld [vmem:[%s646] sm:$0x1]
  %648 = vrot.lane.b32.xlu0 %v647, 34
  %v649 = vpop.permute.xlu0 %648
  %vm650 = vcmask 72704
  %s651 = scalar_lea.vmem %s1, 110
  %652 = vst.msk [vmem:[%s651] sm:$0x1] %vm650, %v649
  %s653 = scalar_lea.vmem %s0, 2
  %v654 = vld [vmem:[%s653] sm:$0x1]
  %655 = vrot.lane.b32.xlu0 %v654, 33
  %v656 = vpop.permute.xlu0 %655
  %vm657 = vcmask 72704
  %s658 = scalar_lea.vmem %s1, 39
  %659 = vst.msk [vmem:[%s658] sm:$0x1] %vm657, %v656
  %s660 = scalar_lea.vmem %s0, 6
  %v661 = vld [vmem:[%s660] sm:$0x1]
  %662 = vrot.lane.b32.xlu0 %v661, 32
  %v663 = vpop.permute.xlu0 %662
  %vm664 = vcmask 72704
  %s665 = scalar_lea.vmem %s1, 96
  %666 = vst.msk [vmem:[%s665] sm:$0x1] %vm664, %v663
  %s667 = scalar_lea.vmem %s0, 1
  %v668 = vld [vmem:[%s667] sm:$0x1]
  %669 = vrot.lane.b32.xlu0 %v668, 31
  %v670 = vpop.permute.xlu0 %669
  %vm671 = vcmask 72704
  %s672 = scalar_lea.vmem %s1, 25
  %673 = vst.msk [vmem:[%s672] sm:$0x1] %vm671, %v670
  %s674 = scalar_lea.vmem %s0, 5
  %v675 = vld [vmem:[%s674] sm:$0x1]
  %676 = vrot.lane.b32.xlu0 %v675, 30
  %v677 = vpop.permute.xlu0 %676
  %vm678 = vcmask 72704
  %s679 = scalar_lea.vmem %s1, 82
  %680 = vst.msk [vmem:[%s679] sm:$0x1] %vm678, %v677
  %v681 = vld [vmem:[%s0] sm:$0x1]
  %682 = vrot.lane.b32.xlu0 %v681, 29
  %v683 = vpop.permute.xlu0 %682
  %vm684 = vcmask 72704
  %s685 = scalar_lea.vmem %s1, 11
  %686 = vst.msk [vmem:[%s685] sm:$0x1] %vm684, %v683
  %s687 = scalar_lea.vmem %s0, 4
  %v688 = vld [vmem:[%s687] sm:$0x1]
  %689 = vrot.lane.b32.xlu0 %v688, 28
  %v690 = vpop.permute.xlu0 %689
  %vm691 = vcmask 72704
  %s692 = scalar_lea.vmem %s1, 68
  %693 = vst.msk [vmem:[%s692] sm:$0x1] %vm691, %v690
  %s694 = scalar_lea.vmem %s0, 8
  %v695 = vld [vmem:[%s694] sm:$0x1]
  %696 = vrot.lane.b32.xlu0 %v695, 27
  %v697 = vpop.permute.xlu0 %696
  %vm698 = vcmask 72704
  %s699 = scalar_lea.vmem %s1, 125
  %700 = vst.msk [vmem:[%s699] sm:$0x1] %vm698, %v697
  %s701 = scalar_lea.vmem %s0, 3
  %v702 = vld [vmem:[%s701] sm:$0x1]
  %703 = vrot.lane.b32.xlu0 %v702, 26
  %v704 = vpop.permute.xlu0 %703
  %vm705 = vcmask 72704
  %s706 = scalar_lea.vmem %s1, 54
  %707 = vst.msk [vmem:[%s706] sm:$0x1] %vm705, %v704
  %s708 = scalar_lea.vmem %s0, 7
  %v709 = vld [vmem:[%s708] sm:$0x1]
  %710 = vrot.lane.b32.xlu0 %v709, 25
  %v711 = vpop.permute.xlu0 %710
  %vm712 = vcmask 72704
  %s713 = scalar_lea.vmem %s1, 111
  %714 = vst.msk [vmem:[%s713] sm:$0x1] %vm712, %v711
  %s715 = scalar_lea.vmem %s0, 2
  %v716 = vld [vmem:[%s715] sm:$0x1]
  %717 = vrot.lane.b32.xlu0 %v716, 24
  %v718 = vpop.permute.xlu0 %717
  %vm719 = vcmask 72704
  %s720 = scalar_lea.vmem %s1, 40
  %721 = vst.msk [vmem:[%s720] sm:$0x1] %vm719, %v718
  %s722 = scalar_lea.vmem %s0, 6
  %v723 = vld [vmem:[%s722] sm:$0x1]
  %724 = vrot.lane.b32.xlu0 %v723, 23
  %v725 = vpop.permute.xlu0 %724
  %vm726 = vcmask 72704
  %s727 = scalar_lea.vmem %s1, 97
  %728 = vst.msk [vmem:[%s727] sm:$0x1] %vm726, %v725
  %s729 = scalar_lea.vmem %s0, 1
  %v730 = vld [vmem:[%s729] sm:$0x1]
  %731 = vrot.lane.b32.xlu0 %v730, 22
  %v732 = vpop.permute.xlu0 %731
  %vm733 = vcmask 72704
  %s734 = scalar_lea.vmem %s1, 26
  %735 = vst.msk [vmem:[%s734] sm:$0x1] %vm733, %v732
  %s736 = scalar_lea.vmem %s0, 5
  %v737 = vld [vmem:[%s736] sm:$0x1]
  %738 = vrot.lane.b32.xlu0 %v737, 21
  %v739 = vpop.permute.xlu0 %738
  %vm740 = vcmask 72704
  %s741 = scalar_lea.vmem %s1, 83
  %742 = vst.msk [vmem:[%s741] sm:$0x1] %vm740, %v739
  %v743 = vld [vmem:[%s0] sm:$0x1]
  %744 = vrot.lane.b32.xlu0 %v743, 20
  %v745 = vpop.permute.xlu0 %744
  %vm746 = vcmask 72704
  %s747 = scalar_lea.vmem %s1, 12
  %748 = vst.msk [vmem:[%s747] sm:$0x1] %vm746, %v745
  %s749 = scalar_lea.vmem %s0, 4
  %v750 = vld [vmem:[%s749] sm:$0x1]
  %751 = vrot.lane.b32.xlu0 %v750, 19
  %v752 = vpop.permute.xlu0 %751
  %vm753 = vcmask 72704
  %s754 = scalar_lea.vmem %s1, 69
  %755 = vst.msk [vmem:[%s754] sm:$0x1] %vm753, %v752
  %s756 = scalar_lea.vmem %s0, 8
  %v757 = vld [vmem:[%s756] sm:$0x1]
  %758 = vrot.lane.b32.xlu0 %v757, 18
  %v759 = vpop.permute.xlu0 %758
  %vm760 = vcmask 72704
  %s761 = scalar_lea.vmem %s1, 126
  %762 = vst.msk [vmem:[%s761] sm:$0x1] %vm760, %v759
  %s763 = scalar_lea.vmem %s0, 3
  %v764 = vld [vmem:[%s763] sm:$0x1]
  %765 = vrot.lane.b32.xlu0 %v764, 17
  %v766 = vpop.permute.xlu0 %765
  %vm767 = vcmask 72704
  %s768 = scalar_lea.vmem %s1, 55
  %769 = vst.msk [vmem:[%s768] sm:$0x1] %vm767, %v766
  %s770 = scalar_lea.vmem %s0, 7
  %v771 = vld [vmem:[%s770] sm:$0x1]
  %772 = vrot.lane.b32.xlu0 %v771, 16
  %v773 = vpop.permute.xlu0 %772
  %vm774 = vcmask 72704
  %s775 = scalar_lea.vmem %s1, 112
  %776 = vst.msk [vmem:[%s775] sm:$0x1] %vm774, %v773
  %s777 = scalar_lea.vmem %s0, 2
  %v778 = vld [vmem:[%s777] sm:$0x1]
  %779 = vrot.lane.b32.xlu0 %v778, 15
  %v780 = vpop.permute.xlu0 %779
  %vm781 = vcmask 72704
  %s782 = scalar_lea.vmem %s1, 41
  %783 = vst.msk [vmem:[%s782] sm:$0x1] %vm781, %v780
  %s784 = scalar_lea.vmem %s0, 6
  %v785 = vld [vmem:[%s784] sm:$0x1]
  %786 = vrot.lane.b32.xlu0 %v785, 14
  %v787 = vpop.permute.xlu0 %786
  %vm788 = vcmask 72704
  %s789 = scalar_lea.vmem %s1, 98
  %790 = vst.msk [vmem:[%s789] sm:$0x1] %vm788, %v787
  %s791 = scalar_lea.vmem %s0, 1
  %v792 = vld [vmem:[%s791] sm:$0x1]
  %793 = vrot.lane.b32.xlu0 %v792, 13
  %v794 = vpop.permute.xlu0 %793
  %vm795 = vcmask 72704
  %s796 = scalar_lea.vmem %s1, 27
  %797 = vst.msk [vmem:[%s796] sm:$0x1] %vm795, %v794
  %s798 = scalar_lea.vmem %s0, 5
  %v799 = vld [vmem:[%s798] sm:$0x1]
  %800 = vrot.lane.b32.xlu0 %v799, 12
  %v801 = vpop.permute.xlu0 %800
  %vm802 = vcmask 72704
  %s803 = scalar_lea.vmem %s1, 84
  %804 = vst.msk [vmem:[%s803] sm:$0x1] %vm802, %v801
  %v805 = vld [vmem:[%s0] sm:$0x1]
  %806 = vrot.lane.b32.xlu0 %v805, 11
  %v807 = vpop.permute.xlu0 %806
  %vm808 = vcmask 72704
  %s809 = scalar_lea.vmem %s1, 13
  %810 = vst.msk [vmem:[%s809] sm:$0x1] %vm808, %v807
  %s811 = scalar_lea.vmem %s0, 4
  %v812 = vld [vmem:[%s811] sm:$0x1]
  %813 = vrot.lane.b32.xlu0 %v812, 10
  %v814 = vpop.permute.xlu0 %813
  %vm815 = vcmask 72704
  %s816 = scalar_lea.vmem %s1, 70
  %817 = vst.msk [vmem:[%s816] sm:$0x1] %vm815, %v814
  %s818 = scalar_lea.vmem %s0, 8
  %v819 = vld [vmem:[%s818] sm:$0x1]
  %820 = vrot.lane.b32.xlu0 %v819, 9
  %v821 = vpop.permute.xlu0 %820
  %vm822 = vcmask 72704
  %s823 = scalar_lea.vmem %s1, 127
  %824 = vst.msk [vmem:[%s823] sm:$0x1] %vm822, %v821
  %s825 = scalar_lea.vmem %s0, 3
  %v826 = vld [vmem:[%s825] sm:$0x1]
  %s827 = scalar_lea.vmem %s0, 4
  %v828 = vld [vmem:[%s827] sm:$0x1]
  %vm829 = vcmask 982016
  %v830 = vsel %vm829, %v828, %v826
  %831 = vrot.lane.b32.xlu0 %v830, 8
  %v832 = vpop.permute.xlu0 %831
  %vm833 = vcmask 64512
  %s834 = scalar_lea.vmem %s1, 56
  %835 = vst.msk [vmem:[%s834] sm:$0x1] %vm833, %v832
  %vm836 = vcmask 72768
  %s837 = scalar_lea.vmem %s1, 56
  %838 = vst.msk [vmem:[%s837] sm:$0x1] %vm836, %v832
  %s839 = scalar_lea.vmem %s0, 7
  %v840 = vld [vmem:[%s839] sm:$0x1]
  %s841 = scalar_lea.vmem %s0, 8
  %v842 = vld [vmem:[%s841] sm:$0x1]
  %vm843 = vcmask 990208
  %v844 = vsel %vm843, %v842, %v840
  %845 = vrot.lane.b32.xlu0 %v844, 7
  %v846 = vpop.permute.xlu0 %845
  %vm847 = vcmask 56320
  %s848 = scalar_lea.vmem %s1, 113
  %849 = vst.msk [vmem:[%s848] sm:$0x1] %vm847, %v846
  %vm850 = vcmask 72760
  %s851 = scalar_lea.vmem %s1, 113
  %852 = vst.msk [vmem:[%s851] sm:$0x1] %vm850, %v846
  %s853 = scalar_lea.vmem %s0, 2
  %v854 = vld [vmem:[%s853] sm:$0x1]
  %s855 = scalar_lea.vmem %s0, 3
  %v856 = vld [vmem:[%s855] sm:$0x1]
  %vm857 = vcmask 998400
  %v858 = vsel %vm857, %v856, %v854
  %859 = vrot.lane.b32.xlu0 %v858, 6
  %v860 = vpop.permute.xlu0 %859
  %vm861 = vcmask 48128
  %s862 = scalar_lea.vmem %s1, 42
  %863 = vst.msk [vmem:[%s862] sm:$0x1] %vm861, %v860
  %vm864 = vcmask 72752
  %s865 = scalar_lea.vmem %s1, 42
  %866 = vst.msk [vmem:[%s865] sm:$0x1] %vm864, %v860
  %s867 = scalar_lea.vmem %s0, 6
  %v868 = vld [vmem:[%s867] sm:$0x1]
  %s869 = scalar_lea.vmem %s0, 7
  %v870 = vld [vmem:[%s869] sm:$0x1]
  %vm871 = vcmask 1006592
  %v872 = vsel %vm871, %v870, %v868
  %873 = vrot.lane.b32.xlu0 %v872, 5
  %v874 = vpop.permute.xlu0 %873
  %vm875 = vcmask 39936
  %s876 = scalar_lea.vmem %s1, 99
  %877 = vst.msk [vmem:[%s876] sm:$0x1] %vm875, %v874
  %vm878 = vcmask 72744
  %s879 = scalar_lea.vmem %s1, 99
  %880 = vst.msk [vmem:[%s879] sm:$0x1] %vm878, %v874
  %s881 = scalar_lea.vmem %s0, 1
  %v882 = vld [vmem:[%s881] sm:$0x1]
  %s883 = scalar_lea.vmem %s0, 2
  %v884 = vld [vmem:[%s883] sm:$0x1]
  %vm885 = vcmask 1014784
  %v886 = vsel %vm885, %v884, %v882
  %887 = vrot.lane.b32.xlu0 %v886, 4
  %v888 = vpop.permute.xlu0 %887
  %vm889 = vcmask 31744
  %s890 = scalar_lea.vmem %s1, 28
  %891 = vst.msk [vmem:[%s890] sm:$0x1] %vm889, %v888
  %vm892 = vcmask 72736
  %s893 = scalar_lea.vmem %s1, 28
  %894 = vst.msk [vmem:[%s893] sm:$0x1] %vm892, %v888
  %s895 = scalar_lea.vmem %s0, 5
  %v896 = vld [vmem:[%s895] sm:$0x1]
  %s897 = scalar_lea.vmem %s0, 6
  %v898 = vld [vmem:[%s897] sm:$0x1]
  %vm899 = vcmask 1022976
  %v900 = vsel %vm899, %v898, %v896
  %901 = vrot.lane.b32.xlu0 %v900, 3
  %v902 = vpop.permute.xlu0 %901
  %vm903 = vcmask 23552
  %s904 = scalar_lea.vmem %s1, 85
  %905 = vst.msk [vmem:[%s904] sm:$0x1] %vm903, %v902
  %vm906 = vcmask 72728
  %s907 = scalar_lea.vmem %s1, 85
  %908 = vst.msk [vmem:[%s907] sm:$0x1] %vm906, %v902
  %v909 = vld [vmem:[%s0] sm:$0x1]
  %s910 = scalar_lea.vmem %s0, 1
  %v911 = vld [vmem:[%s910] sm:$0x1]
  %vm912 = vcmask 1031168
  %v913 = vsel %vm912, %v911, %v909
  %914 = vrot.lane.b32.xlu0 %v913, 2
  %v915 = vpop.permute.xlu0 %914
  %vm916 = vcmask 15360
  %s917 = scalar_lea.vmem %s1, 14
  %918 = vst.msk [vmem:[%s917] sm:$0x1] %vm916, %v915
  %vm919 = vcmask 72720
  %s920 = scalar_lea.vmem %s1, 14
  %921 = vst.msk [vmem:[%s920] sm:$0x1] %vm919, %v915
  %s922 = scalar_lea.vmem %s0, 4
  %v923 = vld [vmem:[%s922] sm:$0x1]
  %s924 = scalar_lea.vmem %s0, 5
  %v925 = vld [vmem:[%s924] sm:$0x1]
  %vm926 = vcmask 1039360
  %v927 = vsel %vm926, %v925, %v923
  %928 = vrot.lane.b32.xlu0 %v927, 1
  %v929 = vpop.permute.xlu0 %928
  %vm930 = vcmask 7168
  %s931 = scalar_lea.vmem %s1, 71
  %932 = vst.msk [vmem:[%s931] sm:$0x1] %vm930, %v929
  %vm933 = vcmask 72712
  %s934 = scalar_lea.vmem %s1, 71
  %935 = vst.msk [vmem:[%s934] sm:$0x1] %vm933, %v929

// kernel: club_forward.1
$region0: #{club_forward.1}
  #allocation0 [shape = 'u32[]', space=smem, size = 0x4, offset = 0x4, fixed_abs, tag = 'smem constant byte address 0x4 - core index']
  #allocation1 [shape = 'u32[144,128]{1,0:T(1,128)}', space=vmem, size = 0x12000, scoped, tag = 'internal scratch']
  #allocation2 [shape = 'f32[18,4]{1,0:T(8,128)}', space=vmem, size = 0x3000, scoped, tag = 'scratch operand']
  #allocation3 [shape = 'f32[36,4]{1,0:T(8,128)}', space=vmem, size = 0x5000, scoped, tag = 'scratch operand']
  #allocation4 [shape = 's32[1]{0}', space=sflag, size = 0x4, scoped, tag = 'scoped memory for club_forward.1']
  #allocation5 [shape = 'u8[512]{0}', space=smem, size = 0x200, scoped, tag = 'prefetched SMEM operand 0']
  %s0 = inlined_call_operand.vmem [shape: s32[2], index: 0, kind: input, shape index: {}]
  %s1 = inlined_call_operand.vmem [shape: f32[18,36], index: 1, kind: input, shape index: {}]
  %s2 = inlined_call_operand.vmem [shape: f32[18,36], index: 2, kind: input, shape index: {}]
  %s3 = inlined_call_operand.vmem [shape: f32[36,4], index: 3, kind: input, shape index: {}]
  %s4 = inlined_call_operand.vmem [shape: f32[36,4], index: 4, kind: input, shape index: {}]
  %s5 = inlined_call_operand.vmem [shape: f32[1,4], index: 5, kind: input, shape index: {}]
  %s6 = inlined_call_operand.vmem [shape: f32[4,128], index: 6, kind: input, shape index: {}]
  %s7 = inlined_call_operand.vmem [shape: f32[1,128], index: 7, kind: input, shape index: {}]
  %s8 = inlined_call_operand.vmem [shape: f32[36,128], index: 8, kind: input, shape index: {}]
  %s9 = inlined_call_operand.vmem [shape: f32[36,128], index: 9, kind: input, shape index: {}]
  %s10 = inlined_call_operand.vmem [shape: f32[1,2], index: 10, kind: input, shape index: {}]
  %s11 = inlined_call_operand.hbm [shape: f32[1,1], index: 11, kind: output, shape index: {}]
  %s12 = sld [smem:[#allocation0]]
  $region50: #{club_forward.1} parent=0
    _
  %s14 = ssub.s32 1, %s12
  %s15 = scalar_select 0, %s14, %s12
  %s16 = sshll.u32 %s0, 4
  %s17 = int_to_ptr.vmem [resolvable:$true] %s16
  %19 = dma.vmem_to_smem %s17, 16, [#allocation5], [#allocation4]
  %20 = dma.done [#allocation4], 16
  %21 = sfence
  $region1: #{club_forward.1} parent=0
    #allocation6 [shape = 'u8[512]{0}', space=vmem, size = 0x400, scoped, tag = 'output window, operand 0, single buffered']
    #allocation7 [shape = 's32[1]{0}', space=sflag, size = 0x4, scoped, tag = 'scoped memory for club_forward.1']
    %22 = vsyncpa [#allocation7], 0
    // Predicated region
    $region2: #{club_forward.1} parent=1 // pred_check
      _
    $region3: #{club_forward.1} parent=1 // pred_check_branch
      %24 = sbr.rel (0) target = $region5
    $region4: #{club_forward.1} parent=1 // pred_region
      _
    $region5: #{club_forward.1} parent=1 // pred_fallthru
      _
    // Predicated region
    $region6: #{club_forward.1} parent=1 // pred_check
      _
    $region7: #{club_forward.1} parent=1 // pred_check_branch
      %26 = sbr.rel (0) target = $region9
    $region8: #{club_forward.1} parent=1 // pred_region
      _
    $region9: #{club_forward.1} parent=1 // pred_fallthru
      _
    // Predicated region
    $region10: #{club_forward.1} parent=1 // pred_check
      _
    $region11: #{club_forward.1} parent=1 // pred_check_branch
      %28 = sbr.rel (0) target = $region13
    $region12: #{club_forward.1} parent=1 // pred_region
      _
    $region13: #{club_forward.1} parent=1 // pred_fallthru
      _
    // Predicated region
    $region14: #{club_forward.1} parent=1 // pred_check
      _
    $region15: #{club_forward.1} parent=1 // pred_check_branch
      %30 = sbr.rel (0) target = $region17
    $region16: #{club_forward.1} parent=1 // pred_region
      _
    $region17: #{club_forward.1} parent=1 // pred_fallthru
      _
    // Predicated region
    $region18: #{club_forward.1} parent=1 // pred_check
      _
    $region19: #{club_forward.1} parent=1 // pred_check_branch
      %32 = sbr.rel (0) target = $region21
    $region20: #{club_forward.1} parent=1 // pred_region
      _
    $region21: #{club_forward.1} parent=1 // pred_fallthru
      _
    // Predicated region
    $region22: #{club_forward.1} parent=1 // pred_check
      _
    $region23: #{club_forward.1} parent=1 // pred_check_branch
      %34 = sbr.rel (0) target = $region25
    $region24: #{club_forward.1} parent=1 // pred_region
      _
    $region25: #{club_forward.1} parent=1 // pred_fallthru
      _
    // Predicated region
    $region26: #{club_forward.1} parent=1 // pred_check
      _
    $region27: #{club_forward.1} parent=1 // pred_check_branch
      %36 = sbr.rel (0) target = $region29
    $region28: #{club_forward.1} parent=1 // pred_region
      _
    $region29: #{club_forward.1} parent=1 // pred_fallthru
      _
    // Predicated region
    $region30: #{club_forward.1} parent=1 // pred_check
      _
    $region31: #{club_forward.1} parent=1 // pred_check_branch
      %38 = sbr.rel (0) target = $region33
    $region32: #{club_forward.1} parent=1 // pred_region
      _
    $region33: #{club_forward.1} parent=1 // pred_fallthru
      _
    // Predicated region
    $region34: #{club_forward.1} parent=1 // pred_check
      _
    $region35: #{club_forward.1} parent=1 // pred_check_branch
      %40 = sbr.rel (0) target = $region37
    $region36: #{club_forward.1} parent=1 // pred_region
      _
    $region37: #{club_forward.1} parent=1 // pred_fallthru
      _
    // Predicated region
    $region38: #{club_forward.1} parent=1 // pred_check
      _
    $region39: #{club_forward.1} parent=1 // pred_check_branch
      %42 = sbr.rel (0) target = $region41
    $region40: #{club_forward.1} parent=1 // pred_region
      _
    $region41: #{club_forward.1} parent=1 // pred_fallthru
      _
    %v43 = vld [vmem:[%s1] sm:$0xff]
    %v44 = vld [vmem:[%s1 + $0x8] sm:$0xff]
    %v45 = vld [vmem:[%s1 + $0x10] sm:$0x3]
    %v46 = vld [vmem:[%s3] sm:$0xff]
    %v47 = vld [vmem:[%s3 + $0x8] sm:$0xff]
    %v48 = vld [vmem:[%s3 + $0x10] sm:$0xff]
    %v49 = vld [vmem:[%s3 + $0x18] sm:$0xff]
    %v50 = vld [vmem:[%s3 + $0x20] sm:$0xf]
    %vm51 = vcmask 293888
    %v53 = vsel %vm51, %v43, 0
    %v56 = vsel %vm51, %v44, 0
    %v59 = vsel %vm51, %v45, 0
    %vm61 = vcmask 1043456
    %v63 = vsel %vm61, %v50, 0
    %65 = vmatprep.subr.mxu0 0.0
    %66 = vmatpush1.msra.mxu0 %v46
    %67 = vmatprep.subr.mxu0 0.0
    %68 = vmatpush1.msra.mxu0 %v47
    %69 = vmatprep.subr.mxu0 0.0
    %70 = vmatpush1.msra.mxu0 %v48
    %71 = vmatprep.subr.mxu0 0.0
    %72 = vmatpush1.msra.mxu0 %v49
    %73 = vmatprep.subr.mxu0 0.0
    %74 = vmatpush1.msra.mxu0 %v63
    %75 = vmatprep.subr.mxu0 0.0
    %76 = vmatpush1.msra.mxu0 0.0
    %77 = vmatprep.subr.mxu0 0.0
    %78 = vmatpush1.msra.mxu0 0.0
    %79 = vmatprep.subr.mxu0 0.0
    %80 = vmatpush1.msra.mxu0 0.0
    %81 = vmatprep.subr.mxu0 0.0
    %82 = vmatpush1.msra.mxu0 0.0
    %83 = vmatprep.subr.mxu0 0.0
    %84 = vmatpush1.msra.mxu0 0.0
    %85 = vmatprep.subr.mxu0 0.0
    %86 = vmatpush1.msra.mxu0 0.0
    %87 = vmatprep.subr.mxu0 0.0
    %88 = vmatpush1.msra.mxu0 0.0
    %89 = vmatprep.subr.mxu0 0.0
    %90 = vmatpush1.msra.mxu0 0.0
    %91 = vmatprep.subr.mxu0 0.0
    %92 = vmatpush1.msra.mxu0 0.0
    %93 = vmatprep.subr.mxu0 0.0
    %94 = vmatpush1.msra.mxu0 0.0
    %95 = vmatprep.subr.mxu0 0.0
    %96 = vmatpush1.msra.mxu0 0.0
    %97 = vmatprep.subr.mxu0 0.0
    %98 = vmatpush1.msra.mxu0 0.0
    %99 = vmatprep.subr.mxu0 0.0
    %100 = vmatpush1.msra.mxu0 0.0
    %101 = vmatprep.subr.mxu0 0.0
    %102 = vmatpush1.msra.mxu0 0.0
    %103 = vmatprep.subr.mxu0 0.0
    %104 = vmatpush1.msra.mxu0 0.0
    %105 = vmatprep.subr.mxu0 0.0
    %106 = vmatpush1.msra.mxu0 0.0
    %107 = vmatprep.subr.mxu0 0.0
    %108 = vmatpush1.msra.mxu0 0.0
    %109 = vmatprep.subr.mxu0 0.0
    %110 = vmatpush1.msra.mxu0 0.0
    %111 = vmatprep.subr.mxu0 0.0
    %112 = vmatpush1.msra.mxu0 0.0
    %113 = vmatprep.subr.mxu0 0.0
    %114 = vmatpush1.msra.mxu0 0.0
    %115 = vmatprep.subr.mxu0 0.0
    %116 = vmatpush1.msra.mxu0 0.0
    %117 = vmatprep.subr.mxu0 0.0
    %118 = vmatpush1.msra.mxu0 0.0
    %119 = vmatprep.subr.mxu0 0.0
    %120 = vmatpush1.msra.mxu0 0.0
    %121 = vmatprep.subr.mxu0 0.0
    %122 = vmatpush1.msra.mxu0 0.0
    %123 = vmatprep.subr.mxu0 0.0
    %124 = vmatpush1.msra.mxu0 0.0
    %125 = vmatprep.subr.mxu0 0.0
    %126 = vmatpush1.msra.mxu0 0.0
    %127 = vmatprep.subr.mxu0 0.0
    %128 = vmatpush1.msra.mxu0 0.0
    %129 = vmatprep.mubr.f32.mxu0 0.0
    %130 = vmatmul.mubr.f32.gmra.mrb[0].mxu0 %v53
    %v131 = vpop.f32.mrb[0].mxu0
    %v132 = vadd.f32 0.0, %v131
    %v133 = vpop.f32.mrb[0].mxu0
    %134 = vmatprep.mubr.f32.mxu0 0.0
    %135 = vmatmul.mubr.f32.gmra.mrb[0].mxu0 %v56
    %v136 = vpop.f32.mrb[0].mxu0
    %v137 = vadd.f32 0.0, %v136
    %v138 = vpop.f32.mrb[0].mxu0
    %139 = vmatprep.mubr.f32.mxu0 0.0
    %140 = vmatmul.mubr.f32.gmra.mrb[0].mxu0 %v59
    %v141 = vpop.f32.mrb[0].mxu0
    %v142 = vadd.f32 0.0, %v141
    %v143 = vpop.f32.mrb[0].mxu0
    %144 = vdwg.mxu0
    %v145 = vld [vmem:[%s2] sm:$0xff]
    %v146 = vld [vmem:[%s2 + $0x8] sm:$0xff]
    %v147 = vld [vmem:[%s2 + $0x10] sm:$0x3]
    %v148 = vld [vmem:[%s4] sm:$0xff]
    %v149 = vld [vmem:[%s4 + $0x8] sm:$0xff]
    %v150 = vld [vmem:[%s4 + $0x10] sm:$0xff]
    %v151 = vld [vmem:[%s4 + $0x18] sm:$0xff]
    %v152 = vld [vmem:[%s4 + $0x20] sm:$0xf]
    %v154 = vsel %vm51, %v145, 0
    %v157 = vsel %vm51, %v146, 0
    %v160 = vsel %vm51, %v147, 0
    %v163 = vsel %vm61, %v152, 0
    %165 = vmatprep.subr.mxu0 0.0
    %166 = vmatpush1.msra.mxu0 %v148
    %167 = vmatprep.subr.mxu0 0.0
    %168 = vmatpush1.msra.mxu0 %v149
    %169 = vmatprep.subr.mxu0 0.0
    %170 = vmatpush1.msra.mxu0 %v150
    %171 = vmatprep.subr.mxu0 0.0
    %172 = vmatpush1.msra.mxu0 %v151
    %173 = vmatprep.subr.mxu0 0.0
    %174 = vmatpush1.msra.mxu0 %v163
    %175 = vmatprep.subr.mxu0 0.0
    %176 = vmatpush1.msra.mxu0 0.0
    %177 = vmatprep.subr.mxu0 0.0
    %178 = vmatpush1.msra.mxu0 0.0
    %179 = vmatprep.subr.mxu0 0.0
    %180 = vmatpush1.msra.mxu0 0.0
    %181 = vmatprep.subr.mxu0 0.0
    %182 = vmatpush1.msra.mxu0 0.0
    %183 = vmatprep.subr.mxu0 0.0
    %184 = vmatpush1.msra.mxu0 0.0
    %185 = vmatprep.subr.mxu0 0.0
    %186 = vmatpush1.msra.mxu0 0.0
    %187 = vmatprep.subr.mxu0 0.0
    %188 = vmatpush1.msra.mxu0 0.0
    %189 = vmatprep.subr.mxu0 0.0
    %190 = vmatpush1.msra.mxu0 0.0
    %191 = vmatprep.subr.mxu0 0.0
    %192 = vmatpush1.msra.mxu0 0.0
    %193 = vmatprep.subr.mxu0 0.0
    %194 = vmatpush1.msra.mxu0 0.0
    %195 = vmatprep.subr.mxu0 0.0
    %196 = vmatpush1.msra.mxu0 0.0
    %197 = vmatprep.subr.mxu0 0.0
    %198 = vmatpush1.msra.mxu0 0.0
    %199 = vmatprep.subr.mxu0 0.0
    %200 = vmatpush1.msra.mxu0 0.0
    %201 = vmatprep.subr.mxu0 0.0
    %202 = vmatpush1.msra.mxu0 0.0
    %203 = vmatprep.subr.mxu0 0.0
    %204 = vmatpush1.msra.mxu0 0.0
    %205 = vmatprep.subr.mxu0 0.0
    %206 = vmatpush1.msra.mxu0 0.0
    %207 = vmatprep.subr.mxu0 0.0
    %208 = vmatpush1.msra.mxu0 0.0
    %209 = vmatprep.subr.mxu0 0.0
    %210 = vmatpush1.msra.mxu0 0.0
    %211 = vmatprep.subr.mxu0 0.0
    %212 = vmatpush1.msra.mxu0 0.0
    %213 = vmatprep.subr.mxu0 0.0
    %214 = vmatpush1.msra.mxu0 0.0
    %215 = vmatprep.subr.mxu0 0.0
    %216 = vmatpush1.msra.mxu0 0.0
    %217 = vmatprep.subr.mxu0 0.0
    %218 = vmatpush1.msra.mxu0 0.0
    %219 = vmatprep.subr.mxu0 0.0
    %220 = vmatpush1.msra.mxu0 0.0
    %221 = vmatprep.subr.mxu0 0.0
    %222 = vmatpush1.msra.mxu0 0.0
    %223 = vmatprep.subr.mxu0 0.0
    %224 = vmatpush1.msra.mxu0 0.0
    %225 = vmatprep.subr.mxu0 0.0
    %226 = vmatpush1.msra.mxu0 0.0
    %227 = vmatprep.subr.mxu0 0.0
    %228 = vmatpush1.msra.mxu0 0.0
    %229 = vmatprep.mubr.f32.mxu0 0.0
    %230 = vmatmul.mubr.f32.gmra.mrb[0].mxu0 %v154
    %v231 = vpop.f32.mrb[0].mxu0
    %v232 = vadd.f32 0.0, %v231
    %v233 = vpop.f32.mrb[0].mxu0
    %234 = vmatprep.mubr.f32.mxu0 0.0
    %235 = vmatmul.mubr.f32.gmra.mrb[0].mxu0 %v157
    %v236 = vpop.f32.mrb[0].mxu0
    %v237 = vadd.f32 0.0, %v236
    %v238 = vpop.f32.mrb[0].mxu0
    %239 = vmatprep.mubr.f32.mxu0 0.0
    %240 = vmatmul.mubr.f32.gmra.mrb[0].mxu0 %v160
    %v241 = vpop.f32.mrb[0].mxu0
    %v242 = vadd.f32 0.0, %v241
    %v243 = vpop.f32.mrb[0].mxu0
    %244 = vdwg.mxu0
    %vm245 = vcmask 31744
    %246 = vst.msk [vmem:[#allocation2] sm:$0xff] %vm245, %v232
    %247 = vst.msk [vmem:[#allocation2 + $0x8] sm:$0xff] %vm245, %v237
    %vm248 = vcmask 25600
    %249 = vst.msk [vmem:[#allocation2 + $0x10] sm:$0x3] %vm248, %v242
    %v250 = vadd.f32 %v132, %v232
    %v251 = vadd.f32 %v137, %v237
    %v252 = vadd.f32 %v142, %v242
    %253 = vst.msk [vmem:[#allocation3] sm:$0xff] %vm245, %v250
    %254 = vst.msk [vmem:[#allocation3 + $0x8] sm:$0xff] %vm245, %v251
    %255 = vst.msk [vmem:[#allocation3 + $0x10] sm:$0x3] %vm248, %v252
    %s256 = sld [smem:[#allocation5]]
    %s257 = smul.u32 %s256, 9
    %s258 = scalar_lea.vmem [#allocation2], %s257
    %v259 = vld [vmem:[%s258] sm:$0xff]
    %v260 = vld [vmem:[%s258 + $0x8] sm:$0x1]
    %v261 = vadd.f32 %v132, %v259
    %v262 = vadd.f32 %v137, %v260
    %263 = vst.msk [vmem:[#allocation3 + $0x12] sm:$0xff] %vm245, %v261
    %vm264 = vcmask 24576
    %265 = vst.msk [vmem:[#allocation3 + $0x1a] sm:$0x1] %vm264, %v262
    %s266 = sld [smem:[#allocation5 + $0x1]]
    %s267 = smul.u32 %s266, 9
    %s268 = scalar_lea.vmem [#allocation2], %s267
    %v269 = vld [vmem:[%s268] sm:$0xff]
    %v270 = vld [vmem:[%s268 + $0x8] sm:$0x1]
    %vm273 = vcmask 1040384
    %v274 = vrot.slane %v269, 7
    %v275 = vrot.slane %v270, 7
    %v276 = vsel %vm273, %v274, %v275
    %v279 = vadd.f32 %v137, %v274
    %v280 = vadd.f32 %v142, %v276
    %vm281 = vcmask 31745
    %282 = vst.msk [vmem:[#allocation3 + $0x1a] sm:$0xfe] %vm281, %v279
    %283 = vst.msk [vmem:[#allocation3 + $0x22] sm:$0x3] %vm248, %v280
    %v284 = vld [vmem:[#allocation3] sm:$0xff]
    %v285 = vld [vmem:[#allocation3 + $0x8] sm:$0xff]
    %v286 = vld [vmem:[#allocation3 + $0x10] sm:$0xff]
    %v287 = vld [vmem:[#allocation3 + $0x18] sm:$0xff]
    %v288 = vld [vmem:[#allocation3 + $0x20] sm:$0xf]
    %v289 = vld [vmem:[%s5] sm:$0x1]
    %v291 = vlaneseq
    %v292 = vshrl.u32 %v291, 7
    %v293 = vsub.s32 0, %v292
    %v294 = vrot.slane %v289, %v293
    %v296 = vadd.f32 %v284, %v294
    %v297 = vadd.f32 %v285, %v294
    %v298 = vadd.f32 %v286, %v294
    %v299 = vadd.f32 %v287, %v294
    %v300 = vadd.f32 %v288, %v294
    %v301 = vmax.f32 %v296, 0.0
    %v302 = vmax.f32 %v297, 0.0
    %v303 = vmax.f32 %v298, 0.0
    %v304 = vmax.f32 %v299, 0.0
    %v305 = vmax.f32 %v300, 0.0
    %v306 = vld [vmem:[%s6] sm:$0xf]
    %308 = vset.pattern.permute.xlu0 0
    %309 = vperm.xlu0 %308, %v301
    %v310 = vpop.permute.xlu0 %309
    %313 = vset.pattern.permute.xlu0 0
    %314 = vperm.xlu0 %313, %v302
    %v315 = vpop.permute.xlu0 %314
    %318 = vset.pattern.permute.xlu0 0
    %319 = vperm.xlu0 %318, %v303
    %v320 = vpop.permute.xlu0 %319
    %323 = vset.pattern.permute.xlu0 0
    %324 = vperm.xlu0 %323, %v304
    %v325 = vpop.permute.xlu0 %324
    %328 = vset.pattern.permute.xlu0 0
    %329 = vperm.xlu0 %328, %v305
    %v330 = vpop.permute.xlu0 %329
    %v332 = vlaneseq
    %v333 = vshrl.u32 %v332, 7
    %v334 = vsub.s32 0, %v333
    %v335 = vrot.slane %v306, %v334
    %v336 = vmul.f32 %v310, %v335
    %v337 = vmul.f32 %v315, %v335
    %v338 = vmul.f32 %v320, %v335
    %v339 = vmul.f32 %v325, %v335
    %v340 = vmul.f32 %v330, %v335
    %341 = vset.pattern.permute.xlu0 1
    %342 = vperm.xlu0 %341, %v301
    %v343 = vpop.permute.xlu0 %342
    %345 = vset.pattern.permute.xlu0 1
    %346 = vperm.xlu0 %345, %v302
    %v347 = vpop.permute.xlu0 %346
    %349 = vset.pattern.permute.xlu0 1
    %350 = vperm.xlu0 %349, %v303
    %v351 = vpop.permute.xlu0 %350
    %353 = vset.pattern.permute.xlu0 1
    %354 = vperm.xlu0 %353, %v304
    %v355 = vpop.permute.xlu0 %354
    %357 = vset.pattern.permute.xlu0 1
    %358 = vperm.xlu0 %357, %v305
    %v359 = vpop.permute.xlu0 %358
    %v361 = vlaneseq
    %v362 = vshrl.u32 %v361, 7
    %v363 = vsub.s32 1, %v362
    %v364 = vrot.slane %v306, %v363
    %v365 = vmul.f32 %v343, %v364
    %v366 = vmul.f32 %v347, %v364
    %v367 = vmul.f32 %v351, %v364
    %v368 = vmul.f32 %v355, %v364
    %v369 = vmul.f32 %v359, %v364
    %v370 = vadd.f32 %v336, %v365
    %v371 = vadd.f32 %v337, %v366
    %v372 = vadd.f32 %v338, %v367
    %v373 = vadd.f32 %v339, %v368
    %v374 = vadd.f32 %v340, %v369
    %375 = vset.pattern.permute.xlu0 2
    %376 = vperm.xlu0 %375, %v301
    %v377 = vpop.permute.xlu0 %376
    %379 = vset.pattern.permute.xlu0 2
    %380 = vperm.xlu0 %379, %v302
    %v381 = vpop.permute.xlu0 %380
    %383 = vset.pattern.permute.xlu0 2
    %384 = vperm.xlu0 %383, %v303
    %v385 = vpop.permute.xlu0 %384
    %387 = vset.pattern.permute.xlu0 2
    %388 = vperm.xlu0 %387, %v304
    %v389 = vpop.permute.xlu0 %388
    %391 = vset.pattern.permute.xlu0 2
    %392 = vperm.xlu0 %391, %v305
    %v393 = vpop.permute.xlu0 %392
    %v395 = vlaneseq
    %v396 = vshrl.u32 %v395, 7
    %v397 = vsub.s32 2, %v396
    %v398 = vrot.slane %v306, %v397
    %v399 = vmul.f32 %v377, %v398
    %v400 = vmul.f32 %v381, %v398
    %v401 = vmul.f32 %v385, %v398
    %v402 = vmul.f32 %v389, %v398
    %v403 = vmul.f32 %v393, %v398
    %v404 = vadd.f32 %v370, %v399
    %v405 = vadd.f32 %v371, %v400
    %v406 = vadd.f32 %v372, %v401
    %v407 = vadd.f32 %v373, %v402
    %v408 = vadd.f32 %v374, %v403
    %409 = vset.pattern.permute.xlu0 3
    %410 = vperm.xlu0 %409, %v301
    %v411 = vpop.permute.xlu0 %410
    %413 = vset.pattern.permute.xlu0 3
    %414 = vperm.xlu0 %413, %v302
    %v415 = vpop.permute.xlu0 %414
    %417 = vset.pattern.permute.xlu0 3
    %418 = vperm.xlu0 %417, %v303
    %v419 = vpop.permute.xlu0 %418
    %421 = vset.pattern.permute.xlu0 3
    %422 = vperm.xlu0 %421, %v304
    %v423 = vpop.permute.xlu0 %422
    %425 = vset.pattern.permute.xlu0 3
    %426 = vperm.xlu0 %425, %v305
    %v427 = vpop.permute.xlu0 %426
    %v429 = vlaneseq
    %v430 = vshrl.u32 %v429, 7
    %v431 = vsub.s32 3, %v430
    %v432 = vrot.slane %v306, %v431
    %v433 = vmul.f32 %v411, %v432
    %v434 = vmul.f32 %v415, %v432
    %v435 = vmul.f32 %v419, %v432
    %v436 = vmul.f32 %v423, %v432
    %v437 = vmul.f32 %v427, %v432
    %v438 = vadd.f32 %v404, %v433
    %v439 = vadd.f32 %v405, %v434
    %v440 = vadd.f32 %v406, %v435
    %v441 = vadd.f32 %v407, %v436
    %v442 = vadd.f32 %v408, %v437
    %v443 = vld [vmem:[%s7] sm:$0x1]
    %v445 = vlaneseq
    %v446 = vshrl.u32 %v445, 7
    %v447 = vsub.s32 0, %v446
    %v448 = vrot.slane %v443, %v447
    %v450 = vadd.f32 %v438, %v448
    %v451 = vadd.f32 %v439, %v448
    %v452 = vadd.f32 %v440, %v448
    %v453 = vadd.f32 %v441, %v448
    %v454 = vadd.f32 %v442, %v448
    %v455 = vmax.f32 %v450, 0.0
    %v456 = vmax.f32 %v451, 0.0
    %v457 = vmax.f32 %v452, 0.0
    %v458 = vmax.f32 %v453, 0.0
    %v459 = vmax.f32 %v454, 0.0
    %v460 = vld [vmem:[%s8] sm:$0xff]
    %v461 = vld [vmem:[%s8 + $0x8] sm:$0xff]
    %v462 = vld [vmem:[%s8 + $0x10] sm:$0xff]
    %v463 = vld [vmem:[%s8 + $0x18] sm:$0xff]
    %v464 = vld [vmem:[%s8 + $0x20] sm:$0xf]
    %v465 = vmul.f32 %v455, %v460
    %v466 = vmul.f32 %v456, %v461
    %v467 = vmul.f32 %v457, %v462
    %v468 = vmul.f32 %v458, %v463
    %v469 = vmul.f32 %v459, %v464
    %470 = vadd.xlane.f32.xlu0 %v465
    %v471 = vpop.xlane.xlu0 %470
    %472 = vadd.xlane.f32.xlu0 %v466
    %v473 = vpop.xlane.xlu0 %472
    %474 = vadd.xlane.f32.xlu0 %v467
    %v475 = vpop.xlane.xlu0 %474
    %476 = vadd.xlane.f32.xlu0 %v468
    %v477 = vpop.xlane.xlu0 %476
    %v478 = vsel %vm61, %v469, 0.0
    %479 = vadd.xlane.f32.xlu0 %v478
    %v480 = vpop.xlane.xlu0 %479
    %v481 = vld [vmem:[%s9] sm:$0xff]
    %v482 = vld [vmem:[%s9 + $0x8] sm:$0xff]
    %v483 = vld [vmem:[%s9 + $0x10] sm:$0xff]
    %v484 = vld [vmem:[%s9 + $0x18] sm:$0xff]
    %v485 = vld [vmem:[%s9 + $0x20] sm:$0xf]
    %v486 = vmul.f32 %v455, %v481
    %v487 = vmul.f32 %v456, %v482
    %v488 = vmul.f32 %v457, %v483
    %v489 = vmul.f32 %v458, %v484
    %v490 = vmul.f32 %v459, %v485
    %491 = vadd.xlane.f32.xlu0 %v486
    %v492 = vpop.xlane.xlu0 %491
    %493 = vadd.xlane.f32.xlu0 %v487
    %v494 = vpop.xlane.xlu0 %493
    %495 = vadd.xlane.f32.xlu0 %v488
    %v496 = vpop.xlane.xlu0 %495
    %497 = vadd.xlane.f32.xlu0 %v489
    %v498 = vpop.xlane.xlu0 %497
    %v499 = vsel %vm61, %v490, 0.0
    %500 = vadd.xlane.f32.xlu0 %v499
    %v501 = vpop.xlane.xlu0 %500
    %vm502 = vcmask 7168
    %v503 = vsel %vm502, %v471, %v492
    %v504 = vsel %vm502, %v473, %v494
    %v505 = vsel %vm502, %v475, %v496
    %v506 = vsel %vm502, %v477, %v498
    %v507 = vsel %vm502, %v480, %v501
    %v508 = vlaneseq
    %v509 = vand.u32 %v508, 127
    %v510 = vlaneseq
    %v511 = vshrl.u32 %v510, 7
    %v512 = vmul.u32 %v511, 9
    %vm513 = vcmp.ge.s32.totalorder %v509, %v512
    %v514 = vadd.s32 %v511, 1
    %v515 = vmul.u32 %v514, 9
    %vm516 = vcmp.lt.s32.totalorder %v509, %v515
    %vm517 = vmand %vm513, %vm516
    %v518 = vsel %vm517, 1.0, 0.0
    %v519 = vld [vmem:[%s10] sm:$0x1]
    %v521 = vlaneseq
    %v522 = vshrl.u32 %v521, 7
    %v523 = vsub.s32 0, %v522
    %v524 = vrot.slane %v519, %v523
    %v527 = vsel %vm51, %v518, 0
    %v530 = vsel %vm61, %v507, 0
    %532 = vmatprep.subr.mxu0 0.0
    %533 = vmatpush1.msra.mxu0 %v503
    %534 = vmatprep.subr.mxu0 0.0
    %535 = vmatpush1.msra.mxu0 %v504
    %536 = vmatprep.subr.mxu0 0.0
    %537 = vmatpush1.msra.mxu0 %v505
    %538 = vmatprep.subr.mxu0 0.0
    %539 = vmatpush1.msra.mxu0 %v506
    %540 = vmatprep.subr.mxu0 0.0
    %541 = vmatpush1.msra.mxu0 %v530
    %542 = vmatprep.subr.mxu0 0.0
    %543 = vmatpush1.msra.mxu0 0.0
    %544 = vmatprep.subr.mxu0 0.0
    %545 = vmatpush1.msra.mxu0 0.0
    %546 = vmatprep.subr.mxu0 0.0
    %547 = vmatpush1.msra.mxu0 0.0
    %548 = vmatprep.subr.mxu0 0.0
    %549 = vmatpush1.msra.mxu0 0.0
    %550 = vmatprep.subr.mxu0 0.0
    %551 = vmatpush1.msra.mxu0 0.0
    %552 = vmatprep.subr.mxu0 0.0
    %553 = vmatpush1.msra.mxu0 0.0
    %554 = vmatprep.subr.mxu0 0.0
    %555 = vmatpush1.msra.mxu0 0.0
    %556 = vmatprep.subr.mxu0 0.0
    %557 = vmatpush1.msra.mxu0 0.0
    %558 = vmatprep.subr.mxu0 0.0
    %559 = vmatpush1.msra.mxu0 0.0
    %560 = vmatprep.subr.mxu0 0.0
    %561 = vmatpush1.msra.mxu0 0.0
    %562 = vmatprep.subr.mxu0 0.0
    %563 = vmatpush1.msra.mxu0 0.0
    %564 = vmatprep.subr.mxu0 0.0
    %565 = vmatpush1.msra.mxu0 0.0
    %566 = vmatprep.subr.mxu0 0.0
    %567 = vmatpush1.msra.mxu0 0.0
    %568 = vmatprep.subr.mxu0 0.0
    %569 = vmatpush1.msra.mxu0 0.0
    %570 = vmatprep.subr.mxu0 0.0
    %571 = vmatpush1.msra.mxu0 0.0
    %572 = vmatprep.subr.mxu0 0.0
    %573 = vmatpush1.msra.mxu0 0.0
    %574 = vmatprep.subr.mxu0 0.0
    %575 = vmatpush1.msra.mxu0 0.0
    %576 = vmatprep.subr.mxu0 0.0
    %577 = vmatpush1.msra.mxu0 0.0
    %578 = vmatprep.subr.mxu0 0.0
    %579 = vmatpush1.msra.mxu0 0.0
    %580 = vmatprep.subr.mxu0 0.0
    %581 = vmatpush1.msra.mxu0 0.0
    %582 = vmatprep.subr.mxu0 0.0
    %583 = vmatpush1.msra.mxu0 0.0
    %584 = vmatprep.subr.mxu0 0.0
    %585 = vmatpush1.msra.mxu0 0.0
    %586 = vmatprep.subr.mxu0 0.0
    %587 = vmatpush1.msra.mxu0 0.0
    %588 = vmatprep.subr.mxu0 0.0
    %589 = vmatpush1.msra.mxu0 0.0
    %590 = vmatprep.subr.mxu0 0.0
    %591 = vmatpush1.msra.mxu0 0.0
    %592 = vmatprep.subr.mxu0 0.0
    %593 = vmatpush1.msra.mxu0 0.0
    %594 = vmatprep.subr.mxu0 0.0
    %595 = vmatpush1.msra.mxu0 0.0
    %596 = vmatprep.mubr.f32.mxu0 0.0
    %597 = vmatmul.mubr.f32.gmra.mrb[0].mxu0 %v527
    %v598 = vpop.f32.mrb[0].mxu0
    %v599 = vadd.f32 %v524, %v598
    %v600 = vpop.f32.mrb[0].mxu0
    %601 = vdwg.mxu0
    %603 = vrot.lane.b32.xlu0 %v599, 127
    %v604 = vpop.permute.xlu0 %603
    %v606 = vmax.f32 %v599, %v604
    %v607 = vsub.f32 %v599, %v606
    %v608 = vmul.f32 %v607, 1.442695
    %v609 = vpow.pop %v608
    %611 = vrot.lane.b32.xlu0 %v606, 1
    %v612 = vpop.permute.xlu0 %611
    %v614 = vsub.f32 %v599, %v612
    %v615 = vmul.f32 %v614, 1.442695
    %v616 = vpow.pop %v615
    %618 = vrot.lane.b32.xlu0 %v616, 127
    %v619 = vpop.permute.xlu0 %618
    %v621 = vadd.f32 %v609, %v619
    %v622 = vlog2.pop %v621
    %v623 = vmul.f32 %v622, 0.6931472
    %v624 = vadd.f32 %v606, %v623
    %vm625 = vcmp.lt.s32.totalorder %v511, 2
    %626 = vrot.lane.b32.xlu0 %v599, 1
    %v627 = vpop.permute.xlu0 %626
    %v629 = vsel %vm625, %v599, %v627
    %631 = vrot.lane.b32.xlu0 %v629, 127
    %v632 = vpop.permute.xlu0 %631
    %v634 = vsub.f32 %v624, %v632
    %vm635 = vcmask 3072
    %v636 = vsel %vm635, %v634, 0.0
    %637 = vadd.xlane.f32.xlu0 %v636
    %v638 = vpop.xlane.xlu0 %637
    %v639 = vrot.slane %v638, 4
    %v640 = vadd.f32 %v638, %v639
    %v641 = vrot.slane %v640, 2
    %v642 = vadd.f32 %v640, %v641
    %v643 = vrot.slane %v642, 1
    %v644 = vadd.f32 %v642, %v643
    %s645 = vtos %v644
    %v646 = vstv %s645
    %v647 = vrcp.pop 2.0
    %v648 = vmul.f32 %v646, %v647
    %vm649 = vcmask 0
    %650 = vst.msk [vmem:[#allocation6] sm:$0x1] %vm649, %v648
    // Predicated region
    $region42: #{club_forward.1} parent=1 // pred_check
      _
    $region43: #{club_forward.1} parent=1 // pred_check_branch
      %652 = sbr.rel (0) target = $region45
    $region44: #{club_forward.1} parent=1 // pred_region
      %s654 = ssub.s32 16, 16
      %655 = vsyncadd [#allocation7], %s654
      %s657 = sshll.u32 [#allocation6], 4
      %s658 = int_to_ptr.vmem [resolvable:$true] %s657
      %660 = dma.vmem_to_hbm [thread:$0]  %s658, 16, %s11, [#allocation7]
    $region45: #{club_forward.1} parent=1 // pred_fallthru
      _
    // Predicated region
    $region46: #{club_forward.1} parent=1 // pred_check
      _
    $region47: #{club_forward.1} parent=1 // pred_check_branch
      %662 = sbr.rel (0) target = $region49
    $region48: #{club_forward.1} parent=1 // pred_region
      %663 = dma.done [#allocation7], 16
    $region49: #{club_forward.1} parent=1 // pred_fallthru
      _
    %664 = vsyncpa [#allocation7], 1

</llo_original>
